<compile_context>
chip_gen: v7x
topology: tpu7x:2x2x1
jax: 0.10.0
libtpu: 0.0.40
codegen_flags: <defaults>
</compile_context>

<pallas_src>
import functools

import jax
import jax.numpy as jnp
from jax.experimental import pallas as pl
from jax.experimental.pallas import tpu as pltpu


# ---------------------------------------------------------------------------
# In-kernel math helpers (also reused by the pure-JAX reference).
# ---------------------------------------------------------------------------
def _layer_norm(x, gamma, beta, eps=1e-5):
    mean = jnp.mean(x, axis=-1, keepdims=True)
    xc = x - mean
    var = jnp.mean(xc * xc, axis=-1, keepdims=True)
    return xc * jax.lax.rsqrt(var + eps) * gamma + beta


def _gelu_tanh(x):
    # TODO(synk): PyTorch F.gelu defaults to the exact erf GELU; the tanh
    # approximation is used here (jnp.tanh has a guaranteed EUP lowering).
    c = 0.7978845608028654  # sqrt(2/pi)
    return 0.5 * x * (1.0 + jnp.tanh(c * (x + 0.044715 * x * x * x)))


# ---------------------------------------------------------------------------
# Fused per-layer kernel
# ---------------------------------------------------------------------------
def _layer_kernel(x_ref, ln1g_ref, ln1b_ref, wqkv_ref, wo_ref, bo_ref,
                  ln2g_ref, ln2b_ref, w1_ref, b1_ref, w2_ref, b2_ref,
                  o_ref, *, heads, dim_head):
    bb, n, d = x_ref.shape
    inner = heads * dim_head
    f32, bf16 = jnp.float32, jnp.bfloat16

    # Flatten the batch block so projection/FFN matmuls see M = bb*n rows.
    x = x_ref[...].reshape(bb * n, d).astype(f32)                 # (R, D)

    # ---------------- Attention (pre-norm) ----------------
    xn = _layer_norm(x, ln1g_ref[...], ln1b_ref[...])             # f32 stats
    qkv = jnp.dot(xn.astype(bf16), wqkv_ref[...],                 # bf16 x bf16
                  preferred_element_type=f32)                     # (R, 3*inner)
    qkv = qkv.astype(bf16).reshape(bb, n, 3 * inner)

    acc = jnp.zeros((bb * n, d), f32)
    for h in range(heads):                                        # static unroll
        lo = h * dim_head
        # softmax scale is already folded into the q columns of w_qkv.
        q = qkv[:, :, lo:lo + dim_head]                           # (bb, n, Dh)
        k = qkv[:, :, inner + lo:inner + lo + dim_head]
        v = qkv[:, :, 2 * inner + lo:2 * inner + lo + dim_head]

        s = jnp.einsum("bnd,bmd->bnm", q, k,
                       preferred_element_type=f32)                # (bb, n, n) f32
        s = s - jnp.max(s, axis=-1, keepdims=True)
        p = jnp.exp(s)
        r = pl.reciprocal(jnp.sum(p, axis=-1, keepdims=True), approx=True)
        oh = jnp.einsum("bnm,bmd->bnd", p.astype(bf16), v,
                        preferred_element_type=f32)               # (bb, n, Dh)
        oh = (oh * r).astype(bf16).reshape(bb * n, dim_head)
        # Accumulate the output projection per head (no concat buffer).
        acc = acc + jnp.dot(oh, wo_ref[h], preferred_element_type=f32)

    x = x + acc + bo_ref[...]                                     # residual

    # ---------------- FeedForward (pre-norm) ----------------
    xn = _layer_norm(x, ln2g_ref[...], ln2b_ref[...])
    hdn = jnp.dot(xn.astype(bf16), w1_ref[...], preferred_element_type=f32)
    hdn = _gelu_tanh(hdn + b1_ref[...])                           # f32
    y = jnp.dot(hdn.astype(bf16), w2_ref[...], preferred_element_type=f32)
    x = x + y + b2_ref[...]                                       # residual

    o_ref[...] = x.reshape(bb, n, d).astype(o_ref.dtype)


# ---------------------------------------------------------------------------
# Wrapper (pallas_call plumbing)
# ---------------------------------------------------------------------------
def transformer_layer(x, p, *, heads, dim_head, block_b):
    B, N, D = x.shape
    inner = heads * dim_head
    mlp = p["w1"].shape[1]
    assert B % block_b == 0
    grid = (B // block_b,)

    kernel = functools.partial(_layer_kernel, heads=heads, dim_head=dim_head)

    # Weights / biases: whole-array VMEM residency (single copy, no pipelining).
    def resident():
        return pl.BlockSpec(memory_space=pltpu.MemorySpace.VMEM)

    # VMEM budget: resident bf16 weights + pipelined activation block.
    weight_bytes = 2 * (D * 3 * inner + inner * D + D * mlp + mlp * D)
    act_bytes = (4 * block_b * N * D * 4            # x in/out, double-buffered f32
                 + block_b * N * 3 * inner * 6      # qkv (f32 + bf16)
                 + block_b * N * N * 8              # scores/probs (one head live)
                 + block_b * N * mlp * 6)           # FFN hidden (f32 + bf16)
    vmem_limit = int(min(64 * 2 ** 20,
                         max(16 * 2 ** 20, 1.5 * (weight_bytes + act_bytes))))

    flops = (2 * B * N * D * 3 * inner              # qkv projection
             + 4 * B * heads * N * N * dim_head     # scores + p@v
             + 2 * B * N * inner * D                # output projection
             + 4 * B * N * D * mlp)                 # FFN
    transcendentals = B * heads * N * N + B * N * mlp
    bytes_accessed = 2 * B * N * D * 4 + weight_bytes

    return pl.pallas_call(
        kernel,
        out_shape=jax.ShapeDtypeStruct((B, N, D), x.dtype),
        grid_spec=pltpu.PrefetchScalarGridSpec(
            num_scalar_prefetch=0,
            grid=grid,
            in_specs=[
                pl.BlockSpec((block_b, N, D), lambda b: (b, 0, 0)),
                resident(),   # ln1 gamma
                resident(),   # ln1 beta
                resident(),   # w_qkv  (bf16, q columns pre-scaled)
                resident(),   # w_out  (heads, dim_head, D) bf16
                resident(),   # b_out
                resident(),   # ln2 gamma
                resident(),   # ln2 beta
                resident(),   # w1 bf16
                resident(),   # b1
                resident(),   # w2 bf16
                resident(),   # b2
            ],
            out_specs=pl.BlockSpec((block_b, N, D), lambda b: (b, 0, 0)),
        ),
        compiler_params=pltpu.CompilerParams(
            dimension_semantics=("parallel",),
            vmem_limit_bytes=vmem_limit),
        cost_estimate=pl.CostEstimate(
            flops=flops,
            transcendentals=transcendentals,
            bytes_accessed=bytes_accessed),
    )(x, p["ln1_g"], p["ln1_b"], p["wqkv"], p["wo"], p["bo"],
      p["ln2_g"], p["ln2_b"], p["w1"], p["b1"], p["w2"], p["b2"])


def _pick_block_b(batch):
    # Prefer >=2 batch rows per grid step (fills the MXU M dim), but keep at
    # least 2 grid steps when possible so both v7x TensorCores get work.
    if batch % 2 == 0 and batch > 2:
        return 2
    return 1


# ---------------------------------------------------------------------------
# Module: JAX/Pallas port of the PyTorch Transformer (dropout=0 -> identity)
# ---------------------------------------------------------------------------
class Transformer:
    def __init__(self, dim, depth, heads, dim_head, mlp_dim, dropout=0.0,
                 key=None):
        assert dropout == 0.0  # TODO(synk): dropout not implemented (inference)
        self.dim, self.depth = dim, depth
        self.heads, self.dim_head, self.mlp_dim = heads, dim_head, mlp_dim
        inner = heads * dim_head
        scale = dim_head ** (-0.5)
        if key is None:
            key = jax.random.PRNGKey(0)
        self.layers = []
        for _ in range(depth):
            key, k0, k1, k2, k3, k4, k5, k6, k7 = jax.random.split(key, 9)
            w_qkv = (dim ** -0.5) * jax.random.normal(k0, (dim, 3 * inner),
                                                      jnp.float32)
            w_out = (inner ** -0.5) * jax.random.normal(k1, (inner, dim),
                                                        jnp.float32)
            w1 = (dim ** -0.5) * jax.random.normal(k2, (dim, mlp_dim),
                                                   jnp.float32)
            w2 = (mlp_dim ** -0.5) * jax.random.normal(k3, (mlp_dim, dim),
                                                       jnp.float32)
            # Kernel-ready parameters: softmax scale folded into the q columns,
            # matmul weights in bf16, w_out pre-split per head.
            wqkv_scaled = w_qkv.at[:, :inner].multiply(scale)
            layer = dict(
                ln1_g=1.0 + 0.1 * jax.random.normal(k4, (1, dim), jnp.float32),
                ln1_b=0.1 * jax.random.normal(k5, (1, dim), jnp.float32),
                wqkv=wqkv_scaled.astype(jnp.bfloat16),
                wo=w_out.reshape(heads, dim_head, dim).astype(jnp.bfloat16),
                bo=0.02 * jax.random.normal(k6, (1, dim), jnp.float32),
                ln2_g=1.0 + 0.1 * jax.random.normal(k7, (1, dim), jnp.float32),
                ln2_b=jnp.zeros((1, dim), jnp.float32),
                w1=w1.astype(jnp.bfloat16),
                b1=jnp.zeros((1, mlp_dim), jnp.float32),
                w2=w2.astype(jnp.bfloat16),
                b2=jnp.zeros((1, dim), jnp.float32),
            )
            self.layers.append(layer)

    def __call__(self, x):
        block_b = _pick_block_b(x.shape[0])
        for p in self.layers:
            x = transformer_layer(x, p, heads=self.heads,
                                  dim_head=self.dim_head, block_b=block_b)
        return x


# ---------------------------------------------------------------------------
# Pure-JAX reference: follows the PyTorch module structure and mirrors the
# kernel numerics (bf16 matmul operands, f32 accumulation / statistics).
# ---------------------------------------------------------------------------
def transformer_ref(x, layers, heads, dim_head):
    f32, bf16 = jnp.float32, jnp.bfloat16
    inner = heads * dim_head
    for p in layers:
        B, N, D = x.shape
        xn = _layer_norm(x, p["ln1_g"], p["ln1_b"])
        qkv = jnp.einsum("bnd,dk->bnk", xn.astype(bf16), p["wqkv"],
                         preferred_element_type=f32).astype(bf16)
        q, k, v = jnp.split(qkv, 3, axis=-1)

        def heads_first(t):
            return t.reshape(B, N, heads, dim_head).transpose(0, 2, 1, 3)

        q, k, v = map(heads_first, (q, k, v))          # scale already folded
        s = jnp.einsum("bhnd,bhmd->bhnm", q, k, preferred_element_type=f32)
        s = s - jnp.max(s, axis=-1, keepdims=True)
        pe = jnp.exp(s)
        denom = jnp.sum(pe, axis=-1, keepdims=True)
        o = jnp.einsum("bhnm,bhmd->bhnd", pe.astype(bf16), v,
                       preferred_element_type=f32) / denom
        o = o.transpose(0, 2, 1, 3).reshape(B, N, inner).astype(bf16)
        wo = p["wo"].reshape(inner, D)
        x = x + jnp.einsum("bnd,dk->bnk", o, wo,
                           preferred_element_type=f32) + p["bo"]

        xn = _layer_norm(x, p["ln2_g"], p["ln2_b"])
        h = jnp.einsum("bnd,dk->bnk", xn.astype(bf16), p["w1"],
                       preferred_element_type=f32) + p["b1"]
        h = _gelu_tanh(h).astype(bf16)
        x = x + jnp.einsum("bnd,dk->bnk", h, p["w2"],
                           preferred_element_type=f32) + p["b2"]
    return x


if __name__ == "__main__":
    key = jax.random.PRNGKey(0)
    kx, kp = jax.random.split(key)

    # Small shapes consistent with the module: batch=2, seq=8, dim=32,
    # heads=4, dim_head=8, mlp_dim=64, depth=2.
    B, N, dim, heads, dim_head, mlp_dim, depth = 2, 8, 32, 4, 8, 64, 2
    x = jax.random.normal(kx, (B, N, dim), dtype=jnp.float32)

    model = Transformer(dim=dim, depth=depth, heads=heads, dim_head=dim_head,
                        mlp_dim=mlp_dim, dropout=0.0, key=kp)

    y = model(x)
    y = jax.block_until_ready(y)

    y_ref = transformer_ref(x, model.layers, heads, dim_head)
    assert y.shape == y_ref.shape, (y.shape, y_ref.shape)
    assert jnp.allclose(y, y_ref, atol=2e-2, rtol=2e-2), (
        "mismatch vs reference transformer: max abs err = "
        f"{jnp.max(jnp.abs(y - y_ref))}")

    print("KERNEL_OK")
</pallas_src>

<mosaic_0001>
module attributes {stable_mosaic.version = 11 : i64} {
  func.func @_layer_kernel(%arg0: i32, %arg1: memref<1x8x32xf32, #tpu.memory_space<vmem>>, %arg2: memref<1x32xf32, #tpu.memory_space<vmem>>, %arg3: memref<1x32xf32, #tpu.memory_space<vmem>>, %arg4: memref<32x96xbf16, #tpu.memory_space<vmem>>, %arg5: memref<4x8x32xbf16, #tpu.memory_space<vmem>>, %arg6: memref<1x32xf32, #tpu.memory_space<vmem>>, %arg7: memref<1x32xf32, #tpu.memory_space<vmem>>, %arg8: memref<1x32xf32, #tpu.memory_space<vmem>>, %arg9: memref<32x64xbf16, #tpu.memory_space<vmem>>, %arg10: memref<1x64xf32, #tpu.memory_space<vmem>>, %arg11: memref<64x32xbf16, #tpu.memory_space<vmem>>, %arg12: memref<1x32xf32, #tpu.memory_space<vmem>>, %arg13: memref<1x8x32xf32, #tpu.memory_space<vmem>>) attributes {dimension_semantics = [#tpu.dimension_semantics<parallel>], iteration_bounds = array<i64: 2>, scalar_prefetch = 0 : i64, scratch_operands = 0 : i64, tpu.core_type = #tpu.core_type<tc>, window_params = [{transform_indices = @transform_0, window_bounds = array<i64: 1, 8, 32>}, {pipeline_mode = #tpu.pipeline_mode<synchronous>, transform_indices = @transform_1, window_bounds = array<i64: 1, 32>}, {pipeline_mode = #tpu.pipeline_mode<synchronous>, transform_indices = @transform_2, window_bounds = array<i64: 1, 32>}, {pipeline_mode = #tpu.pipeline_mode<synchronous>, transform_indices = @transform_3, window_bounds = array<i64: 32, 96>}, {pipeline_mode = #tpu.pipeline_mode<synchronous>, transform_indices = @transform_4, window_bounds = array<i64: 4, 8, 32>}, {pipeline_mode = #tpu.pipeline_mode<synchronous>, transform_indices = @transform_5, window_bounds = array<i64: 1, 32>}, {pipeline_mode = #tpu.pipeline_mode<synchronous>, transform_indices = @transform_6, window_bounds = array<i64: 1, 32>}, {pipeline_mode = #tpu.pipeline_mode<synchronous>, transform_indices = @transform_7, window_bounds = array<i64: 1, 32>}, {pipeline_mode = #tpu.pipeline_mode<synchronous>, transform_indices = @transform_8, window_bounds = array<i64: 32, 64>}, {pipeline_mode = #tpu.pipeline_mode<synchronous>, transform_indices = @transform_9, window_bounds = array<i64: 1, 64>}, {pipeline_mode = #tpu.pipeline_mode<synchronous>, transform_indices = @transform_10, window_bounds = array<i64: 64, 32>}, {pipeline_mode = #tpu.pipeline_mode<synchronous>, transform_indices = @transform_11, window_bounds = array<i64: 1, 32>}, {transform_indices = @transform_12, window_bounds = array<i64: 1, 8, 32>}]} {
    %c0 = arith.constant 0 : index
    %c0_0 = arith.constant 0 : index
    %c0_1 = arith.constant 0 : index
    %0 = vector.load %arg1[%c0, %c0_0, %c0_1] : memref<1x8x32xf32, #tpu.memory_space<vmem>>, vector<1x8x32xf32>
    %1 = vector.shape_cast %0 : vector<1x8x32xf32> to vector<8x32xf32>
    %c0_2 = arith.constant 0 : index
    %c0_3 = arith.constant 0 : index
    %2 = vector.load %arg2[%c0_2, %c0_3] : memref<1x32xf32, #tpu.memory_space<vmem>>, vector<1x32xf32>
    %c0_4 = arith.constant 0 : index
    %c0_5 = arith.constant 0 : index
    %3 = vector.load %arg3[%c0_4, %c0_5] : memref<1x32xf32, #tpu.memory_space<vmem>>, vector<1x32xf32>
    %cst = arith.constant dense<0.000000e+00> : vector<8xf32>
    %4 = vector.multi_reduction <add>, %1, %cst [1] : vector<8x32xf32> to vector<8xf32>
    %5 = vector.shape_cast %4 : vector<8xf32> to vector<8x1xf32>
    %cst_6 = arith.constant 3.200000e+01 : f32
    %6 = vector.broadcast %cst_6 : f32 to vector<8x1xf32>
    %7 = arith.divf %5, %6 : vector<8x1xf32>
    %8 = vector.broadcast %7 : vector<8x1xf32> to vector<8x32xf32>
    %9 = arith.subf %1, %8 : vector<8x32xf32>
    %10 = arith.mulf %9, %9 : vector<8x32xf32>
    %cst_7 = arith.constant dense<0.000000e+00> : vector<8xf32>
    %11 = vector.multi_reduction <add>, %10, %cst_7 [1] : vector<8x32xf32> to vector<8xf32>
    %12 = vector.shape_cast %11 : vector<8xf32> to vector<8x1xf32>
    %cst_8 = arith.constant 3.200000e+01 : f32
    %13 = vector.broadcast %cst_8 : f32 to vector<8x1xf32>
    %14 = arith.divf %12, %13 : vector<8x1xf32>
    %cst_9 = arith.constant 9.99999974E-6 : f32
    %15 = vector.broadcast %cst_9 : f32 to vector<8x1xf32>
    %16 = arith.addf %14, %15 : vector<8x1xf32>
    %17 = math.rsqrt %16 : vector<8x1xf32>
    %18 = vector.broadcast %17 : vector<8x1xf32> to vector<8x32xf32>
    %19 = arith.mulf %9, %18 : vector<8x32xf32>
    %20 = vector.broadcast %2 : vector<1x32xf32> to vector<8x32xf32>
    %21 = arith.mulf %19, %20 : vector<8x32xf32>
    %22 = vector.broadcast %3 : vector<1x32xf32> to vector<8x32xf32>
    %23 = arith.addf %21, %22 : vector<8x32xf32>
    %24 = arith.truncf %23 : vector<8x32xf32> to vector<8x32xbf16>
    %c0_10 = arith.constant 0 : index
    %c0_11 = arith.constant 0 : index
    %25 = vector.load %arg4[%c0_10, %c0_11] : memref<32x96xbf16, #tpu.memory_space<vmem>>, vector<32x96xbf16>
    %cst_12 = arith.constant dense<0.000000e+00> : vector<8x96xf32>
    %26 = tpu.matmul %24, %25, %cst_12 {dimension_numbers = #tpu.dot_dimension_numbers<[1], [0], [0], [1], [0, 0, 1, 1], [], []>} : vector<8x32xbf16>, vector<32x96xbf16>, vector<8x96xf32> -> vector<8x96xf32>
    %27 = arith.truncf %26 : vector<8x96xf32> to vector<8x96xbf16>
    %28 = vector.shape_cast %27 : vector<8x96xbf16> to vector<1x8x96xbf16>
    %cst_13 = arith.constant 0.000000e+00 : f32
    %29 = vector.broadcast %cst_13 : f32 to vector<8x32xf32>
    %30 = vector.extract_strided_slice %28 {offsets = [0, 0, 0], sizes = [1, 8, 8], strides = [1, 1, 1]} : vector<1x8x96xbf16> to vector<1x8x8xbf16>
    %31 = vector.extract_strided_slice %28 {offsets = [0, 0, 32], sizes = [1, 8, 8], strides = [1, 1, 1]} : vector<1x8x96xbf16> to vector<1x8x8xbf16>
    %32 = vector.extract_strided_slice %28 {offsets = [0, 0, 64], sizes = [1, 8, 8], strides = [1, 1, 1]} : vector<1x8x96xbf16> to vector<1x8x8xbf16>
    "tpu.trace_start"() <{level = 10 : i32, message = "bnd,bmd->bnm"}> : () -> ()
    %cst_14 = arith.constant dense<0.000000e+00> : vector<1x8x8xf32>
    %33 = tpu.matmul %30, %31, %cst_14 {dimension_numbers = #tpu.dot_dimension_numbers<[2], [2], [1], [1], [0, 0, 0, 1, 1, 1], [0], [0]>} : vector<1x8x8xbf16>, vector<1x8x8xbf16>, vector<1x8x8xf32> -> vector<1x8x8xf32>
    "tpu.trace_stop"() : () -> ()
    %cst_15 = arith.constant dense<0xFF800000> : vector<1x8xf32>
    %34 = vector.multi_reduction <maximumf>, %33, %cst_15 [2] : vector<1x8x8xf32> to vector<1x8xf32>
    %35 = vector.shape_cast %34 : vector<1x8xf32> to vector<1x8x1xf32>
    %36 = vector.broadcast %35 : vector<1x8x1xf32> to vector<1x8x8xf32>
    %37 = arith.subf %33, %36 : vector<1x8x8xf32>
    %38 = math.exp %37 : vector<1x8x8xf32>
    %cst_16 = arith.constant dense<0.000000e+00> : vector<1x8xf32>
    %39 = vector.multi_reduction <add>, %38, %cst_16 [2] : vector<1x8x8xf32> to vector<1x8xf32>
    %40 = vector.shape_cast %39 : vector<1x8xf32> to vector<1x8x1xf32>
    %41 = tpu.reciprocal %40 {approx = true} : vector<1x8x1xf32> -> vector<1x8x1xf32>
    %42 = arith.truncf %38 : vector<1x8x8xf32> to vector<1x8x8xbf16>
    "tpu.trace_start"() <{level = 10 : i32, message = "bnm,bmd->bnd"}> : () -> ()
    %cst_17 = arith.constant dense<0.000000e+00> : vector<1x8x8xf32>
    %43 = tpu.matmul %42, %32, %cst_17 {dimension_numbers = #tpu.dot_dimension_numbers<[2], [1], [1], [2], [0, 0, 0, 1, 1, 2], [0], [0]>} : vector<1x8x8xbf16>, vector<1x8x8xbf16>, vector<1x8x8xf32> -> vector<1x8x8xf32>
    "tpu.trace_stop"() : () -> ()
    %44 = vector.broadcast %41 : vector<1x8x1xf32> to vector<1x8x8xf32>
    %45 = arith.mulf %43, %44 : vector<1x8x8xf32>
    %46 = arith.truncf %45 : vector<1x8x8xf32> to vector<1x8x8xbf16>
    %47 = vector.shape_cast %46 : vector<1x8x8xbf16> to vector<8x8xbf16>
    %c0_18 = arith.constant 0 : index
    %c0_19 = arith.constant 0 : index
    %c0_20 = arith.constant 0 : index
    %48 = vector.load %arg5[%c0_18, %c0_19, %c0_20] : memref<4x8x32xbf16, #tpu.memory_space<vmem>>, vector<1x8x32xbf16>
    %49 = vector.shape_cast %48 : vector<1x8x32xbf16> to vector<8x32xbf16>
    %cst_21 = arith.constant dense<0.000000e+00> : vector<8x32xf32>
    %50 = tpu.matmul %47, %49, %cst_21 {dimension_numbers = #tpu.dot_dimension_numbers<[1], [0], [0], [1], [0, 0, 1, 1], [], []>} : vector<8x8xbf16>, vector<8x32xbf16>, vector<8x32xf32> -> vector<8x32xf32>
    %51 = arith.addf %29, %50 : vector<8x32xf32>
    %52 = vector.extract_strided_slice %28 {offsets = [0, 0, 8], sizes = [1, 8, 8], strides = [1, 1, 1]} : vector<1x8x96xbf16> to vector<1x8x8xbf16>
    %53 = vector.extract_strided_slice %28 {offsets = [0, 0, 40], sizes = [1, 8, 8], strides = [1, 1, 1]} : vector<1x8x96xbf16> to vector<1x8x8xbf16>
    %54 = vector.extract_strided_slice %28 {offsets = [0, 0, 72], sizes = [1, 8, 8], strides = [1, 1, 1]} : vector<1x8x96xbf16> to vector<1x8x8xbf16>
    "tpu.trace_start"() <{level = 10 : i32, message = "bnd,bmd->bnm"}> : () -> ()
    %cst_22 = arith.constant dense<0.000000e+00> : vector<1x8x8xf32>
    %55 = tpu.matmul %52, %53, %cst_22 {dimension_numbers = #tpu.dot_dimension_numbers<[2], [2], [1], [1], [0, 0, 0, 1, 1, 1], [0], [0]>} : vector<1x8x8xbf16>, vector<1x8x8xbf16>, vector<1x8x8xf32> -> vector<1x8x8xf32>
    "tpu.trace_stop"() : () -> ()
    %cst_23 = arith.constant dense<0xFF800000> : vector<1x8xf32>
    %56 = vector.multi_reduction <maximumf>, %55, %cst_23 [2] : vector<1x8x8xf32> to vector<1x8xf32>
    %57 = vector.shape_cast %56 : vector<1x8xf32> to vector<1x8x1xf32>
    %58 = vector.broadcast %57 : vector<1x8x1xf32> to vector<1x8x8xf32>
    %59 = arith.subf %55, %58 : vector<1x8x8xf32>
    %60 = math.exp %59 : vector<1x8x8xf32>
    %cst_24 = arith.constant dense<0.000000e+00> : vector<1x8xf32>
    %61 = vector.multi_reduction <add>, %60, %cst_24 [2] : vector<1x8x8xf32> to vector<1x8xf32>
    %62 = vector.shape_cast %61 : vector<1x8xf32> to vector<1x8x1xf32>
    %63 = tpu.reciprocal %62 {approx = true} : vector<1x8x1xf32> -> vector<1x8x1xf32>
    %64 = arith.truncf %60 : vector<1x8x8xf32> to vector<1x8x8xbf16>
    "tpu.trace_start"() <{level = 10 : i32, message = "bnm,bmd->bnd"}> : () -> ()
    %cst_25 = arith.constant dense<0.000000e+00> : vector<1x8x8xf32>
    %65 = tpu.matmul %64, %54, %cst_25 {dimension_numbers = #tpu.dot_dimension_numbers<[2], [1], [1], [2], [0, 0, 0, 1, 1, 2], [0], [0]>} : vector<1x8x8xbf16>, vector<1x8x8xbf16>, vector<1x8x8xf32> -> vector<1x8x8xf32>
    "tpu.trace_stop"() : () -> ()
    %66 = vector.broadcast %63 : vector<1x8x1xf32> to vector<1x8x8xf32>
    %67 = arith.mulf %65, %66 : vector<1x8x8xf32>
    %68 = arith.truncf %67 : vector<1x8x8xf32> to vector<1x8x8xbf16>
    %69 = vector.shape_cast %68 : vector<1x8x8xbf16> to vector<8x8xbf16>
    %c1 = arith.constant 1 : index
    %c0_26 = arith.constant 0 : index
    %c0_27 = arith.constant 0 : index
    %70 = vector.load %arg5[%c1, %c0_26, %c0_27] : memref<4x8x32xbf16, #tpu.memory_space<vmem>>, vector<1x8x32xbf16>
    %71 = vector.shape_cast %70 : vector<1x8x32xbf16> to vector<8x32xbf16>
    %cst_28 = arith.constant dense<0.000000e+00> : vector<8x32xf32>
    %72 = tpu.matmul %69, %71, %cst_28 {dimension_numbers = #tpu.dot_dimension_numbers<[1], [0], [0], [1], [0, 0, 1, 1], [], []>} : vector<8x8xbf16>, vector<8x32xbf16>, vector<8x32xf32> -> vector<8x32xf32>
    %73 = arith.addf %51, %72 : vector<8x32xf32>
    %74 = vector.extract_strided_slice %28 {offsets = [0, 0, 16], sizes = [1, 8, 8], strides = [1, 1, 1]} : vector<1x8x96xbf16> to vector<1x8x8xbf16>
    %75 = vector.extract_strided_slice %28 {offsets = [0, 0, 48], sizes = [1, 8, 8], strides = [1, 1, 1]} : vector<1x8x96xbf16> to vector<1x8x8xbf16>
    %76 = vector.extract_strided_slice %28 {offsets = [0, 0, 80], sizes = [1, 8, 8], strides = [1, 1, 1]} : vector<1x8x96xbf16> to vector<1x8x8xbf16>
    "tpu.trace_start"() <{level = 10 : i32, message = "bnd,bmd->bnm"}> : () -> ()
    %cst_29 = arith.constant dense<0.000000e+00> : vector<1x8x8xf32>
    %77 = tpu.matmul %74, %75, %cst_29 {dimension_numbers = #tpu.dot_dimension_numbers<[2], [2], [1], [1], [0, 0, 0, 1, 1, 1], [0], [0]>} : vector<1x8x8xbf16>, vector<1x8x8xbf16>, vector<1x8x8xf32> -> vector<1x8x8xf32>
    "tpu.trace_stop"() : () -> ()
    %cst_30 = arith.constant dense<0xFF800000> : vector<1x8xf32>
    %78 = vector.multi_reduction <maximumf>, %77, %cst_30 [2] : vector<1x8x8xf32> to vector<1x8xf32>
    %79 = vector.shape_cast %78 : vector<1x8xf32> to vector<1x8x1xf32>
    %80 = vector.broadcast %79 : vector<1x8x1xf32> to vector<1x8x8xf32>
    %81 = arith.subf %77, %80 : vector<1x8x8xf32>
    %82 = math.exp %81 : vector<1x8x8xf32>
    %cst_31 = arith.constant dense<0.000000e+00> : vector<1x8xf32>
    %83 = vector.multi_reduction <add>, %82, %cst_31 [2] : vector<1x8x8xf32> to vector<1x8xf32>
    %84 = vector.shape_cast %83 : vector<1x8xf32> to vector<1x8x1xf32>
    %85 = tpu.reciprocal %84 {approx = true} : vector<1x8x1xf32> -> vector<1x8x1xf32>
    %86 = arith.truncf %82 : vector<1x8x8xf32> to vector<1x8x8xbf16>
    "tpu.trace_start"() <{level = 10 : i32, message = "bnm,bmd->bnd"}> : () -> ()
    %cst_32 = arith.constant dense<0.000000e+00> : vector<1x8x8xf32>
    %87 = tpu.matmul %86, %76, %cst_32 {dimension_numbers = #tpu.dot_dimension_numbers<[2], [1], [1], [2], [0, 0, 0, 1, 1, 2], [0], [0]>} : vector<1x8x8xbf16>, vector<1x8x8xbf16>, vector<1x8x8xf32> -> vector<1x8x8xf32>
    "tpu.trace_stop"() : () -> ()
    %88 = vector.broadcast %85 : vector<1x8x1xf32> to vector<1x8x8xf32>
    %89 = arith.mulf %87, %88 : vector<1x8x8xf32>
    %90 = arith.truncf %89 : vector<1x8x8xf32> to vector<1x8x8xbf16>
    %91 = vector.shape_cast %90 : vector<1x8x8xbf16> to vector<8x8xbf16>
    %c2 = arith.constant 2 : index
    %c0_33 = arith.constant 0 : index
    %c0_34 = arith.constant 0 : index
    %92 = vector.load %arg5[%c2, %c0_33, %c0_34] : memref<4x8x32xbf16, #tpu.memory_space<vmem>>, vector<1x8x32xbf16>
    %93 = vector.shape_cast %92 : vector<1x8x32xbf16> to vector<8x32xbf16>
    %cst_35 = arith.constant dense<0.000000e+00> : vector<8x32xf32>
    %94 = tpu.matmul %91, %93, %cst_35 {dimension_numbers = #tpu.dot_dimension_numbers<[1], [0], [0], [1], [0, 0, 1, 1], [], []>} : vector<8x8xbf16>, vector<8x32xbf16>, vector<8x32xf32> -> vector<8x32xf32>
    %95 = arith.addf %73, %94 : vector<8x32xf32>
    %96 = vector.extract_strided_slice %28 {offsets = [0, 0, 24], sizes = [1, 8, 8], strides = [1, 1, 1]} : vector<1x8x96xbf16> to vector<1x8x8xbf16>
    %97 = vector.extract_strided_slice %28 {offsets = [0, 0, 56], sizes = [1, 8, 8], strides = [1, 1, 1]} : vector<1x8x96xbf16> to vector<1x8x8xbf16>
    %98 = vector.extract_strided_slice %28 {offsets = [0, 0, 88], sizes = [1, 8, 8], strides = [1, 1, 1]} : vector<1x8x96xbf16> to vector<1x8x8xbf16>
    "tpu.trace_start"() <{level = 10 : i32, message = "bnd,bmd->bnm"}> : () -> ()
    %cst_36 = arith.constant dense<0.000000e+00> : vector<1x8x8xf32>
    %99 = tpu.matmul %96, %97, %cst_36 {dimension_numbers = #tpu.dot_dimension_numbers<[2], [2], [1], [1], [0, 0, 0, 1, 1, 1], [0], [0]>} : vector<1x8x8xbf16>, vector<1x8x8xbf16>, vector<1x8x8xf32> -> vector<1x8x8xf32>
    "tpu.trace_stop"() : () -> ()
    %cst_37 = arith.constant dense<0xFF800000> : vector<1x8xf32>
    %100 = vector.multi_reduction <maximumf>, %99, %cst_37 [2] : vector<1x8x8xf32> to vector<1x8xf32>
    %101 = vector.shape_cast %100 : vector<1x8xf32> to vector<1x8x1xf32>
    %102 = vector.broadcast %101 : vector<1x8x1xf32> to vector<1x8x8xf32>
    %103 = arith.subf %99, %102 : vector<1x8x8xf32>
    %104 = math.exp %103 : vector<1x8x8xf32>
    %cst_38 = arith.constant dense<0.000000e+00> : vector<1x8xf32>
    %105 = vector.multi_reduction <add>, %104, %cst_38 [2] : vector<1x8x8xf32> to vector<1x8xf32>
    %106 = vector.shape_cast %105 : vector<1x8xf32> to vector<1x8x1xf32>
    %107 = tpu.reciprocal %106 {approx = true} : vector<1x8x1xf32> -> vector<1x8x1xf32>
    %108 = arith.truncf %104 : vector<1x8x8xf32> to vector<1x8x8xbf16>
    "tpu.trace_start"() <{level = 10 : i32, message = "bnm,bmd->bnd"}> : () -> ()
    %cst_39 = arith.constant dense<0.000000e+00> : vector<1x8x8xf32>
    %109 = tpu.matmul %108, %98, %cst_39 {dimension_numbers = #tpu.dot_dimension_numbers<[2], [1], [1], [2], [0, 0, 0, 1, 1, 2], [0], [0]>} : vector<1x8x8xbf16>, vector<1x8x8xbf16>, vector<1x8x8xf32> -> vector<1x8x8xf32>
    "tpu.trace_stop"() : () -> ()
    %110 = vector.broadcast %107 : vector<1x8x1xf32> to vector<1x8x8xf32>
    %111 = arith.mulf %109, %110 : vector<1x8x8xf32>
    %112 = arith.truncf %111 : vector<1x8x8xf32> to vector<1x8x8xbf16>
    %113 = vector.shape_cast %112 : vector<1x8x8xbf16> to vector<8x8xbf16>
    %c3 = arith.constant 3 : index
    %c0_40 = arith.constant 0 : index
    %c0_41 = arith.constant 0 : index
    %114 = vector.load %arg5[%c3, %c0_40, %c0_41] : memref<4x8x32xbf16, #tpu.memory_space<vmem>>, vector<1x8x32xbf16>
    %115 = vector.shape_cast %114 : vector<1x8x32xbf16> to vector<8x32xbf16>
    %cst_42 = arith.constant dense<0.000000e+00> : vector<8x32xf32>
    %116 = tpu.matmul %113, %115, %cst_42 {dimension_numbers = #tpu.dot_dimension_numbers<[1], [0], [0], [1], [0, 0, 1, 1], [], []>} : vector<8x8xbf16>, vector<8x32xbf16>, vector<8x32xf32> -> vector<8x32xf32>
    %117 = arith.addf %95, %116 : vector<8x32xf32>
    %118 = arith.addf %1, %117 : vector<8x32xf32>
    %c0_43 = arith.constant 0 : index
    %c0_44 = arith.constant 0 : index
    %119 = vector.load %arg6[%c0_43, %c0_44] : memref<1x32xf32, #tpu.memory_space<vmem>>, vector<1x32xf32>
    %120 = vector.broadcast %119 : vector<1x32xf32> to vector<8x32xf32>
    %121 = arith.addf %118, %120 : vector<8x32xf32>
    %c0_45 = arith.constant 0 : index
    %c0_46 = arith.constant 0 : index
    %122 = vector.load %arg7[%c0_45, %c0_46] : memref<1x32xf32, #tpu.memory_space<vmem>>, vector<1x32xf32>
    %c0_47 = arith.constant 0 : index
    %c0_48 = arith.constant 0 : index
    %123 = vector.load %arg8[%c0_47, %c0_48] : memref<1x32xf32, #tpu.memory_space<vmem>>, vector<1x32xf32>
    %cst_49 = arith.constant dense<0.000000e+00> : vector<8xf32>
    %124 = vector.multi_reduction <add>, %121, %cst_49 [1] : vector<8x32xf32> to vector<8xf32>
    %125 = vector.shape_cast %124 : vector<8xf32> to vector<8x1xf32>
    %cst_50 = arith.constant 3.200000e+01 : f32
    %126 = vector.broadcast %cst_50 : f32 to vector<8x1xf32>
    %127 = arith.divf %125, %126 : vector<8x1xf32>
    %128 = vector.broadcast %127 : vector<8x1xf32> to vector<8x32xf32>
    %129 = arith.subf %121, %128 : vector<8x32xf32>
    %130 = arith.mulf %129, %129 : vector<8x32xf32>
    %cst_51 = arith.constant dense<0.000000e+00> : vector<8xf32>
    %131 = vector.multi_reduction <add>, %130, %cst_51 [1] : vector<8x32xf32> to vector<8xf32>
    %132 = vector.shape_cast %131 : vector<8xf32> to vector<8x1xf32>
    %cst_52 = arith.constant 3.200000e+01 : f32
    %133 = vector.broadcast %cst_52 : f32 to vector<8x1xf32>
    %134 = arith.divf %132, %133 : vector<8x1xf32>
    %cst_53 = arith.constant 9.99999974E-6 : f32
    %135 = vector.broadcast %cst_53 : f32 to vector<8x1xf32>
    %136 = arith.addf %134, %135 : vector<8x1xf32>
    %137 = math.rsqrt %136 : vector<8x1xf32>
    %138 = vector.broadcast %137 : vector<8x1xf32> to vector<8x32xf32>
    %139 = arith.mulf %129, %138 : vector<8x32xf32>
    %140 = vector.broadcast %122 : vector<1x32xf32> to vector<8x32xf32>
    %141 = arith.mulf %139, %140 : vector<8x32xf32>
    %142 = vector.broadcast %123 : vector<1x32xf32> to vector<8x32xf32>
    %143 = arith.addf %141, %142 : vector<8x32xf32>
    %144 = arith.truncf %143 : vector<8x32xf32> to vector<8x32xbf16>
    %c0_54 = arith.constant 0 : index
    %c0_55 = arith.constant 0 : index
    %145 = vector.load %arg9[%c0_54, %c0_55] : memref<32x64xbf16, #tpu.memory_space<vmem>>, vector<32x64xbf16>
    %cst_56 = arith.constant dense<0.000000e+00> : vector<8x64xf32>
    %146 = tpu.matmul %144, %145, %cst_56 {dimension_numbers = #tpu.dot_dimension_numbers<[1], [0], [0], [1], [0, 0, 1, 1], [], []>} : vector<8x32xbf16>, vector<32x64xbf16>, vector<8x64xf32> -> vector<8x64xf32>
    %c0_57 = arith.constant 0 : index
    %c0_58 = arith.constant 0 : index
    %147 = vector.load %arg10[%c0_57, %c0_58] : memref<1x64xf32, #tpu.memory_space<vmem>>, vector<1x64xf32>
    %148 = vector.broadcast %147 : vector<1x64xf32> to vector<8x64xf32>
    %149 = arith.addf %146, %148 : vector<8x64xf32>
    %cst_59 = arith.constant 5.000000e-01 : f32
    %150 = vector.broadcast %cst_59 : f32 to vector<8x64xf32>
    %151 = arith.mulf %150, %149 : vector<8x64xf32>
    %cst_60 = arith.constant 4.471500e-02 : f32
    %152 = vector.broadcast %cst_60 : f32 to vector<8x64xf32>
    %153 = arith.mulf %152, %149 : vector<8x64xf32>
    %154 = arith.mulf %153, %149 : vector<8x64xf32>
    %155 = arith.mulf %154, %149 : vector<8x64xf32>
    %156 = arith.addf %149, %155 : vector<8x64xf32>
    %cst_61 = arith.constant 0.797884583 : f32
    %157 = vector.broadcast %cst_61 : f32 to vector<8x64xf32>
    %158 = arith.mulf %157, %156 : vector<8x64xf32>
    %159 = math.tanh %158 : vector<8x64xf32>
    %cst_62 = arith.constant 1.000000e+00 : f32
    %160 = vector.broadcast %cst_62 : f32 to vector<8x64xf32>
    %161 = arith.addf %160, %159 : vector<8x64xf32>
    %162 = arith.mulf %151, %161 : vector<8x64xf32>
    %163 = arith.truncf %162 : vector<8x64xf32> to vector<8x64xbf16>
    %c0_63 = arith.constant 0 : index
    %c0_64 = arith.constant 0 : index
    %164 = vector.load %arg11[%c0_63, %c0_64] : memref<64x32xbf16, #tpu.memory_space<vmem>>, vector<64x32xbf16>
    %cst_65 = arith.constant dense<0.000000e+00> : vector<8x32xf32>
    %165 = tpu.matmul %163, %164, %cst_65 {dimension_numbers = #tpu.dot_dimension_numbers<[1], [0], [0], [1], [0, 0, 1, 1], [], []>} : vector<8x64xbf16>, vector<64x32xbf16>, vector<8x32xf32> -> vector<8x32xf32>
    %166 = arith.addf %121, %165 : vector<8x32xf32>
    %c0_66 = arith.constant 0 : index
    %c0_67 = arith.constant 0 : index
    %167 = vector.load %arg12[%c0_66, %c0_67] : memref<1x32xf32, #tpu.memory_space<vmem>>, vector<1x32xf32>
    %168 = vector.broadcast %167 : vector<1x32xf32> to vector<8x32xf32>
    %169 = arith.addf %166, %168 : vector<8x32xf32>
    %170 = vector.shape_cast %169 : vector<8x32xf32> to vector<1x8x32xf32>
    %c0_68 = arith.constant 0 : index
    %c0_69 = arith.constant 0 : index
    %c0_70 = arith.constant 0 : index
    %171 = vector.load %arg13[%c0_68, %c0_69, %c0_70] : memref<1x8x32xf32, #tpu.memory_space<vmem>>, vector<1x8x32xf32>
    tpu.vector_store %arg13[%c0_68, %c0_69, %c0_70], %170 {strides = array<i32>} : memref<1x8x32xf32, #tpu.memory_space<vmem>>, vector<1x8x32xf32>,
    return
  }
  func.func @transform_0(%arg0: i32) -> (i32, i32, i32) {
    %c0_i32 = arith.constant 0 : i32
    %c0_i32_0 = arith.constant 0 : i32
    %c0_i32_1 = arith.constant 0 : i32
    return %arg0, %c0_i32, %c0_i32_0 : i32, i32, i32
  }
  func.func @transform_1(%arg0: i32) -> (i32, i32) {
    %c0_i32 = arith.constant 0 : i32
    %c0_i32_0 = arith.constant 0 : i32
    %c0_i32_1 = arith.constant 0 : i32
    return %c0_i32, %c0_i32_0 : i32, i32
  }
  func.func @transform_2(%arg0: i32) -> (i32, i32) {
    %c0_i32 = arith.constant 0 : i32
    %c0_i32_0 = arith.constant 0 : i32
    %c0_i32_1 = arith.constant 0 : i32
    return %c0_i32, %c0_i32_0 : i32, i32
  }
  func.func @transform_3(%arg0: i32) -> (i32, i32) {
    %c0_i32 = arith.constant 0 : i32
    %c0_i32_0 = arith.constant 0 : i32
    %c0_i32_1 = arith.constant 0 : i32
    return %c0_i32, %c0_i32_0 : i32, i32
  }
  func.func @transform_4(%arg0: i32) -> (i32, i32, i32) {
    %c0_i32 = arith.constant 0 : i32
    %c0_i32_0 = arith.constant 0 : i32
    %c0_i32_1 = arith.constant 0 : i32
    %c0_i32_2 = arith.constant 0 : i32
    return %c0_i32, %c0_i32_0, %c0_i32_1 : i32, i32, i32
  }
  func.func @transform_5(%arg0: i32) -> (i32, i32) {
    %c0_i32 = arith.constant 0 : i32
    %c0_i32_0 = arith.constant 0 : i32
    %c0_i32_1 = arith.constant 0 : i32
    return %c0_i32, %c0_i32_0 : i32, i32
  }
  func.func @transform_6(%arg0: i32) -> (i32, i32) {
    %c0_i32 = arith.constant 0 : i32
    %c0_i32_0 = arith.constant 0 : i32
    %c0_i32_1 = arith.constant 0 : i32
    return %c0_i32, %c0_i32_0 : i32, i32
  }
  func.func @transform_7(%arg0: i32) -> (i32, i32) {
    %c0_i32 = arith.constant 0 : i32
    %c0_i32_0 = arith.constant 0 : i32
    %c0_i32_1 = arith.constant 0 : i32
    return %c0_i32, %c0_i32_0 : i32, i32
  }
  func.func @transform_8(%arg0: i32) -> (i32, i32) {
    %c0_i32 = arith.constant 0 : i32
    %c0_i32_0 = arith.constant 0 : i32
    %c0_i32_1 = arith.constant 0 : i32
    return %c0_i32, %c0_i32_0 : i32, i32
  }
  func.func @transform_9(%arg0: i32) -> (i32, i32) {
    %c0_i32 = arith.constant 0 : i32
    %c0_i32_0 = arith.constant 0 : i32
    %c0_i32_1 = arith.constant 0 : i32
    return %c0_i32, %c0_i32_0 : i32, i32
  }
  func.func @transform_10(%arg0: i32) -> (i32, i32) {
    %c0_i32 = arith.constant 0 : i32
    %c0_i32_0 = arith.constant 0 : i32
    %c0_i32_1 = arith.constant 0 : i32
    return %c0_i32, %c0_i32_0 : i32, i32
  }
  func.func @transform_11(%arg0: i32) -> (i32, i32) {
    %c0_i32 = arith.constant 0 : i32
    %c0_i32_0 = arith.constant 0 : i32
    %c0_i32_1 = arith.constant 0 : i32
    return %c0_i32, %c0_i32_0 : i32, i32
  }
  func.func @transform_12(%arg0: i32) -> (i32, i32, i32) {
    %c0_i32 = arith.constant 0 : i32
    %c0_i32_0 = arith.constant 0 : i32
    %c0_i32_1 = arith.constant 0 : i32
    return %arg0, %c0_i32, %c0_i32_0 : i32, i32, i32
  }
}

</mosaic_0001>

<llo_original>
// kernel: tpu_custom_call.1
$region0: #{tpu_custom_call.1}
  #allocation0 [shape = 'u32[]', space=smem, size = 0x4, offset = 0x4, fixed_abs, tag = 'smem constant byte address 0x4 - core index']
  #allocation1 [shape = 'u32[144,128]{1,0:T(1,128)}', space=vmem, size = 0x12000, scoped, tag = 'internal scratch']
  %s0 = inlined_call_operand.vmem [shape: f32[2,8,32], index: 0, kind: input, shape index: {}]
  %s1 = inlined_call_operand.vmem [shape: f32[1,32], index: 1, kind: input, shape index: {}]
  %s2 = inlined_call_operand.vmem [shape: f32[1,32], index: 2, kind: input, shape index: {}]
  %s3 = inlined_call_operand.vmem [shape: bf16[32,96], index: 3, kind: input, shape index: {}]
  %s4 = inlined_call_operand.vmem [shape: bf16[4,8,32], index: 4, kind: input, shape index: {}]
  %s5 = inlined_call_operand.vmem [shape: f32[1,32], index: 5, kind: input, shape index: {}]
  %s6 = inlined_call_operand.vmem [shape: f32[1,32], index: 6, kind: input, shape index: {}]
  %s7 = inlined_call_operand.vmem [shape: f32[1,32], index: 7, kind: input, shape index: {}]
  %s8 = inlined_call_operand.hbm [shape: bf16[32,64], index: 8, kind: input, shape index: {}]
  %s9 = inlined_call_operand.vmem [shape: f32[1,64], index: 9, kind: input, shape index: {}]
  %s10 = inlined_call_operand.vmem [shape: bf16[64,32], index: 10, kind: input, shape index: {}]
  %s11 = inlined_call_operand.vmem [shape: f32[1,32], index: 11, kind: input, shape index: {}]
  %s12 = inlined_call_operand.hbm [shape: f32[2,8,32], index: 12, kind: output, shape index: {}]
  %s13 = sld [smem:[#allocation0]]
  $region85: #{tpu_custom_call.1} parent=0
    _
  %s15 = ssub.s32 1, %s13
  %s16 = scalar_select 0, %s15, %s13
  $region1: #{tpu_custom_call.1} parent=0
    #allocation2 [shape = 'u8[8192]{0}', space=vmem, size = 0x2000, scoped, tag = 'input window, operand 8, single buffered']
    #allocation3 [shape = 's32[2]{0}', space=sflag, size = 0x8, scoped, tag = 'scoped memory for tpu_custom_call.1']
    #allocation4 [shape = 's32[2]{0}', space=sflag, size = 0x8, scoped, tag = 'scoped memory for tpu_custom_call.1']
    #allocation5 [shape = 'u8[8192]{0}', space=vmem, size = 0x2000, scoped, tag = 'output window, operand 0']
    %17 = vsyncpa [#allocation3], 0
    %18 = vsyncpa [#allocation4], 0
    %s19 = scalar_lea.sflag [#allocation4], 1
    %20 = vsyncpa %s19, 0
    loop: start=0, step=1, limit=4
    $region2: #{tpu_custom_call.1} parent=1 // loop_pre_header
      _
    $region3: #{tpu_custom_call.1} parent=1 // loop_header
      %s22 = sphi 0, %s26
      %p23 = scmp.ge.s32.totalorder %s22, 4
      %s32 = sphi 0, %s34
      %s35 = sphi 0, %s32
      %s36 = sphi 0, %s35
      %s52 = sphi 0, %s36
      %s56 = sphi 0, %s56
      %s58 = sphi 0, %s56
      %s59 = sphi 0, %s58
      %s73 = sphi 0, %s59
      %s77 = sphi 0, %s77
      %s79 = sphi 0, %s77
      %s80 = sphi 0, %s79
      %s94 = sphi 0, %s80
      %s98 = sphi 0, %s98
      %s100 = sphi 0, %s98
      %s101 = sphi 0, %s100
      %s115 = sphi 0, %s101
      %s119 = sphi 0, %s119
      %s121 = sphi 0, %s119
      %s122 = sphi 0, %s121
      %s136 = sphi 0, %s122
      %s140 = sphi 0, %s140
      %s142 = sphi 0, %s140
      %s143 = sphi 0, %s142
      %s157 = sphi 0, %s143
      %s161 = sphi 0, %s161
      %s163 = sphi 0, %s161
      %s164 = sphi 0, %s163
      %s178 = sphi 0, %s164
      %s182 = sphi 0, %s182
      %s184 = sphi 0, %s182
      %s185 = sphi 0, %s184
      %s199 = sphi 0, %s185
      %s203 = sphi 0, %s203
      %s205 = sphi 0, %s203
      %s206 = sphi 0, %s205
      %s220 = sphi 0, %s206
      %s224 = sphi 0, %s224
      %s226 = sphi 0, %s224
      %s227 = sphi 0, %s226
      %s241 = sphi 0, %s227
      %s245 = sphi 0, %s245
      %s247 = sphi 0, %s245
      %s248 = sphi 0, %s247
      %s262 = sphi 0, %s248
      %s266 = sphi 0, %s266
      %s268 = sphi 0, %s266
      %s269 = sphi 0, %s268
      %s283 = sphi 0, %s269
      %s289 = sphi 0, %s291
      %s292 = sphi 0, %s289
      %s293 = sphi 0, %s292
      %s309 = sphi 0, %s293
    $region4: #{tpu_custom_call.1} parent=1 // loop_header_branch
      %25 = sbr.rel (%p23) target = $region8
    $region5: #{tpu_custom_call.1} parent=1 // loop_body
      %s27 = ssub.s32 %s22, 1
      %s28 = ssub.s32 %s22, 2
      %s29 = sadd.s32 %s22, 1
      %s30 = ssub.s32 %s22, %s29
      %p31 = scmp.eq.s32.totalorder %s30, 0
      %s33 = sadd.s32 %s32, 1
      %s34 = scalar_select %p31, %s32, %s33
      %p37 = pneg %p31
      %p38 = scmp.eq.s32.totalorder %s22, 1
      %p39 = por %p37, %p38
      %p40 = scmp.ne.s32.totalorder %s32, %s35
      %p41 = scmp.eq.s32.totalorder %s22, 0
      %p42 = por %p40, %p41
      %p43 = scmp.ne.s32.totalorder %s32, %s35
      %p44 = scmp.eq.s32.totalorder %s27, 1
      %p45 = por %p43, %p44
      %p46 = scmp.ne.s32.totalorder %s35, %s36
      %p47 = scmp.eq.s32.totalorder %s27, 0
      %p48 = por %p46, %p47
      %p49 = scmp.ne.s32.totalorder %s35, %s36
      %p50 = scmp.eq.s32.totalorder %s28, 1
      %p51 = por %p49, %p50
      %p53 = scmp.ne.s32.totalorder %s36, %s52
      %p54 = scmp.eq.s32.totalorder %s28, 0
      %p55 = por %p53, %p54
      %s57 = sadd.s32 %s56, 1
      %p60 = scmp.eq.s32.totalorder %s22, 1
      %p61 = scmp.ne.s32.totalorder %s56, %s58
      %p62 = scmp.eq.s32.totalorder %s22, 0
      %p63 = por %p61, %p62
      %p64 = scmp.ne.s32.totalorder %s56, %s58
      %p65 = scmp.eq.s32.totalorder %s27, 1
      %p66 = por %p64, %p65
      %p67 = scmp.ne.s32.totalorder %s58, %s59
      %p68 = scmp.eq.s32.totalorder %s27, 0
      %p69 = por %p67, %p68
      %p70 = scmp.ne.s32.totalorder %s58, %s59
      %p71 = scmp.eq.s32.totalorder %s28, 1
      %p72 = por %p70, %p71
      %p74 = scmp.ne.s32.totalorder %s59, %s73
      %p75 = scmp.eq.s32.totalorder %s28, 0
      %p76 = por %p74, %p75
      %s78 = sadd.s32 %s77, 1
      %p81 = scmp.eq.s32.totalorder %s22, 1
      %p82 = scmp.ne.s32.totalorder %s77, %s79
      %p83 = scmp.eq.s32.totalorder %s22, 0
      %p84 = por %p82, %p83
      %p85 = scmp.ne.s32.totalorder %s77, %s79
      %p86 = scmp.eq.s32.totalorder %s27, 1
      %p87 = por %p85, %p86
      %p88 = scmp.ne.s32.totalorder %s79, %s80
      %p89 = scmp.eq.s32.totalorder %s27, 0
      %p90 = por %p88, %p89
      %p91 = scmp.ne.s32.totalorder %s79, %s80
      %p92 = scmp.eq.s32.totalorder %s28, 1
      %p93 = por %p91, %p92
      %p95 = scmp.ne.s32.totalorder %s80, %s94
      %p96 = scmp.eq.s32.totalorder %s28, 0
      %p97 = por %p95, %p96
      %s99 = sadd.s32 %s98, 1
      %p102 = scmp.eq.s32.totalorder %s22, 1
      %p103 = scmp.ne.s32.totalorder %s98, %s100
      %p104 = scmp.eq.s32.totalorder %s22, 0
      %p105 = por %p103, %p104
      %p106 = scmp.ne.s32.totalorder %s98, %s100
      %p107 = scmp.eq.s32.totalorder %s27, 1
      %p108 = por %p106, %p107
      %p109 = scmp.ne.s32.totalorder %s100, %s101
      %p110 = scmp.eq.s32.totalorder %s27, 0
      %p111 = por %p109, %p110
      %p112 = scmp.ne.s32.totalorder %s100, %s101
      %p113 = scmp.eq.s32.totalorder %s28, 1
      %p114 = por %p112, %p113
      %p116 = scmp.ne.s32.totalorder %s101, %s115
      %p117 = scmp.eq.s32.totalorder %s28, 0
      %p118 = por %p116, %p117
      %s120 = sadd.s32 %s119, 1
      %p123 = scmp.eq.s32.totalorder %s22, 1
      %p124 = scmp.ne.s32.totalorder %s119, %s121
      %p125 = scmp.eq.s32.totalorder %s22, 0
      %p126 = por %p124, %p125
      %p127 = scmp.ne.s32.totalorder %s119, %s121
      %p128 = scmp.eq.s32.totalorder %s27, 1
      %p129 = por %p127, %p128
      %p130 = scmp.ne.s32.totalorder %s121, %s122
      %p131 = scmp.eq.s32.totalorder %s27, 0
      %p132 = por %p130, %p131
      %p133 = scmp.ne.s32.totalorder %s121, %s122
      %p134 = scmp.eq.s32.totalorder %s28, 1
      %p135 = por %p133, %p134
      %p137 = scmp.ne.s32.totalorder %s122, %s136
      %p138 = scmp.eq.s32.totalorder %s28, 0
      %p139 = por %p137, %p138
      %s141 = sadd.s32 %s140, 1
      %p144 = scmp.eq.s32.totalorder %s22, 1
      %p145 = scmp.ne.s32.totalorder %s140, %s142
      %p146 = scmp.eq.s32.totalorder %s22, 0
      %p147 = por %p145, %p146
      %p148 = scmp.ne.s32.totalorder %s140, %s142
      %p149 = scmp.eq.s32.totalorder %s27, 1
      %p150 = por %p148, %p149
      %p151 = scmp.ne.s32.totalorder %s142, %s143
      %p152 = scmp.eq.s32.totalorder %s27, 0
      %p153 = por %p151, %p152
      %p154 = scmp.ne.s32.totalorder %s142, %s143
      %p155 = scmp.eq.s32.totalorder %s28, 1
      %p156 = por %p154, %p155
      %p158 = scmp.ne.s32.totalorder %s143, %s157
      %p159 = scmp.eq.s32.totalorder %s28, 0
      %p160 = por %p158, %p159
      %s162 = sadd.s32 %s161, 1
      %p165 = scmp.eq.s32.totalorder %s22, 1
      %p166 = scmp.ne.s32.totalorder %s161, %s163
      %p167 = scmp.eq.s32.totalorder %s22, 0
      %p168 = por %p166, %p167
      %p169 = scmp.ne.s32.totalorder %s161, %s163
      %p170 = scmp.eq.s32.totalorder %s27, 1
      %p171 = por %p169, %p170
      %p172 = scmp.ne.s32.totalorder %s163, %s164
      %p173 = scmp.eq.s32.totalorder %s27, 0
      %p174 = por %p172, %p173
      %p175 = scmp.ne.s32.totalorder %s163, %s164
      %p176 = scmp.eq.s32.totalorder %s28, 1
      %p177 = por %p175, %p176
      %p179 = scmp.ne.s32.totalorder %s164, %s178
      %p180 = scmp.eq.s32.totalorder %s28, 0
      %p181 = por %p179, %p180
      %s183 = sadd.s32 %s182, 1
      %p186 = scmp.eq.s32.totalorder %s22, 1
      %p187 = scmp.ne.s32.totalorder %s182, %s184
      %p188 = scmp.eq.s32.totalorder %s22, 0
      %p189 = por %p187, %p188
      %p190 = scmp.ne.s32.totalorder %s182, %s184
      %p191 = scmp.eq.s32.totalorder %s27, 1
      %p192 = por %p190, %p191
      %p193 = scmp.ne.s32.totalorder %s184, %s185
      %p194 = scmp.eq.s32.totalorder %s27, 0
      %p195 = por %p193, %p194
      %p196 = scmp.ne.s32.totalorder %s184, %s185
      %p197 = scmp.eq.s32.totalorder %s28, 1
      %p198 = por %p196, %p197
      %p200 = scmp.ne.s32.totalorder %s185, %s199
      %p201 = scmp.eq.s32.totalorder %s28, 0
      %p202 = por %p200, %p201
      %s204 = sadd.s32 %s203, 1
      %p207 = scmp.eq.s32.totalorder %s22, 1
      %p208 = scmp.ne.s32.totalorder %s203, %s205
      %p209 = scmp.eq.s32.totalorder %s22, 0
      %p210 = por %p208, %p209
      %p211 = scmp.ne.s32.totalorder %s203, %s205
      %p212 = scmp.eq.s32.totalorder %s27, 1
      %p213 = por %p211, %p212
      %p214 = scmp.ne.s32.totalorder %s205, %s206
      %p215 = scmp.eq.s32.totalorder %s27, 0
      %p216 = por %p214, %p215
      %p217 = scmp.ne.s32.totalorder %s205, %s206
      %p218 = scmp.eq.s32.totalorder %s28, 1
      %p219 = por %p217, %p218
      %p221 = scmp.ne.s32.totalorder %s206, %s220
      %p222 = scmp.eq.s32.totalorder %s28, 0
      %p223 = por %p221, %p222
      %s225 = sadd.s32 %s224, 1
      %p228 = scmp.eq.s32.totalorder %s22, 1
      %p229 = scmp.ne.s32.totalorder %s224, %s226
      %p230 = scmp.eq.s32.totalorder %s22, 0
      %p231 = por %p229, %p230
      %p232 = scmp.ne.s32.totalorder %s224, %s226
      %p233 = scmp.eq.s32.totalorder %s27, 1
      %p234 = por %p232, %p233
      %p235 = scmp.ne.s32.totalorder %s226, %s227
      %p236 = scmp.eq.s32.totalorder %s27, 0
      %p237 = por %p235, %p236
      %p238 = scmp.ne.s32.totalorder %s226, %s227
      %p239 = scmp.eq.s32.totalorder %s28, 1
      %p240 = por %p238, %p239
      %p242 = scmp.ne.s32.totalorder %s227, %s241
      %p243 = scmp.eq.s32.totalorder %s28, 0
      %p244 = por %p242, %p243
      %s246 = sadd.s32 %s245, 1
      %p249 = scmp.eq.s32.totalorder %s22, 1
      %p250 = scmp.ne.s32.totalorder %s245, %s247
      %p251 = scmp.eq.s32.totalorder %s22, 0
      %p252 = por %p250, %p251
      %p253 = scmp.ne.s32.totalorder %s245, %s247
      %p254 = scmp.eq.s32.totalorder %s27, 1
      %p255 = por %p253, %p254
      %p256 = scmp.ne.s32.totalorder %s247, %s248
      %p257 = scmp.eq.s32.totalorder %s27, 0
      %p258 = por %p256, %p257
      %p259 = scmp.ne.s32.totalorder %s247, %s248
      %p260 = scmp.eq.s32.totalorder %s28, 1
      %p261 = por %p259, %p260
      %p263 = scmp.ne.s32.totalorder %s248, %s262
      %p264 = scmp.eq.s32.totalorder %s28, 0
      %p265 = por %p263, %p264
      %s267 = sadd.s32 %s266, 1
      %p270 = scmp.eq.s32.totalorder %s22, 1
      %p271 = scmp.ne.s32.totalorder %s266, %s268
      %p272 = scmp.eq.s32.totalorder %s22, 0
      %p273 = por %p271, %p272
      %p274 = scmp.ne.s32.totalorder %s266, %s268
      %p275 = scmp.eq.s32.totalorder %s27, 1
      %p276 = por %p274, %p275
      %p277 = scmp.ne.s32.totalorder %s268, %s269
      %p278 = scmp.eq.s32.totalorder %s27, 0
      %p279 = por %p277, %p278
      %p280 = scmp.ne.s32.totalorder %s268, %s269
      %p281 = scmp.eq.s32.totalorder %s28, 1
      %p282 = por %p280, %p281
      %p284 = scmp.ne.s32.totalorder %s269, %s283
      %p285 = scmp.eq.s32.totalorder %s28, 0
      %p286 = por %p284, %p285
      %s287 = ssub.s32 %s22, %s29
      %p288 = scmp.eq.s32.totalorder %s287, 0
      %s290 = sadd.s32 %s289, 1
      %s291 = scalar_select %p288, %s289, %s290
      %p294 = pneg %p288
      %p295 = scmp.eq.s32.totalorder %s22, 1
      %p296 = por %p294, %p295
      %p297 = scmp.ne.s32.totalorder %s289, %s292
      %p298 = scmp.eq.s32.totalorder %s22, 0
      %p299 = por %p297, %p298
      %p300 = scmp.ne.s32.totalorder %s289, %s292
      %p301 = scmp.eq.s32.totalorder %s27, 1
      %p302 = por %p300, %p301
      %p303 = scmp.ne.s32.totalorder %s292, %s293
      %p304 = scmp.eq.s32.totalorder %s27, 0
      %p305 = por %p303, %p304
      %p306 = scmp.ne.s32.totalorder %s292, %s293
      %p307 = scmp.eq.s32.totalorder %s28, 1
      %p308 = por %p306, %p307
      %p310 = scmp.ne.s32.totalorder %s293, %s309
      %p311 = scmp.eq.s32.totalorder %s28, 0
      %p312 = por %p310, %p311
      %p313 = scmp.le.s32.totalorder 1, %s22
      %p314 = scmp.lt.s32.totalorder %s22, 3
      %p315 = pnand %p313, %p314
      %p316 = pneg %p315
      // Predicated region
      $region9: #{tpu_custom_call.1} parent=5 // pred_check
        _
      $region10: #{tpu_custom_call.1} parent=5 // pred_check_branch
        %318 = sbr.rel (%p315) target = $region12
      $region11: #{tpu_custom_call.1} parent=5 // pred_region
        %s319 = ssub.s32 %s22, 1
        // Predicated region
        $region13: #{tpu_custom_call.1} parent=11 // pred_check
          %p320 = pneg %p69
        $region14: #{tpu_custom_call.1} parent=11 // pred_check_branch
          %322 = sbr.rel (%p320) target = $region16
        $region15: #{tpu_custom_call.1} parent=11 // pred_region
          _
        $region16: #{tpu_custom_call.1} parent=11 // pred_fallthru
          _
        // Predicated region
        $region17: #{tpu_custom_call.1} parent=11 // pred_check
          %p323 = pneg %p90
        $region18: #{tpu_custom_call.1} parent=11 // pred_check_branch
          %325 = sbr.rel (%p323) target = $region20
        $region19: #{tpu_custom_call.1} parent=11 // pred_region
          _
        $region20: #{tpu_custom_call.1} parent=11 // pred_fallthru
          _
        // Predicated region
        $region21: #{tpu_custom_call.1} parent=11 // pred_check
          %p326 = pneg %p111
        $region22: #{tpu_custom_call.1} parent=11 // pred_check_branch
          %328 = sbr.rel (%p326) target = $region24
        $region23: #{tpu_custom_call.1} parent=11 // pred_region
          _
        $region24: #{tpu_custom_call.1} parent=11 // pred_fallthru
          _
        // Predicated region
        $region25: #{tpu_custom_call.1} parent=11 // pred_check
          %p329 = pneg %p132
        $region26: #{tpu_custom_call.1} parent=11 // pred_check_branch
          %331 = sbr.rel (%p329) target = $region28
        $region27: #{tpu_custom_call.1} parent=11 // pred_region
          _
        $region28: #{tpu_custom_call.1} parent=11 // pred_fallthru
          _
        // Predicated region
        $region29: #{tpu_custom_call.1} parent=11 // pred_check
          %p332 = pneg %p153
        $region30: #{tpu_custom_call.1} parent=11 // pred_check_branch
          %334 = sbr.rel (%p332) target = $region32
        $region31: #{tpu_custom_call.1} parent=11 // pred_region
          _
        $region32: #{tpu_custom_call.1} parent=11 // pred_fallthru
          _
        // Predicated region
        $region33: #{tpu_custom_call.1} parent=11 // pred_check
          %p335 = pneg %p174
        $region34: #{tpu_custom_call.1} parent=11 // pred_check_branch
          %337 = sbr.rel (%p335) target = $region36
        $region35: #{tpu_custom_call.1} parent=11 // pred_region
          _
        $region36: #{tpu_custom_call.1} parent=11 // pred_fallthru
          _
        // Predicated region
        $region37: #{tpu_custom_call.1} parent=11 // pred_check
          %p338 = pneg %p195
        $region38: #{tpu_custom_call.1} parent=11 // pred_check_branch
          %340 = sbr.rel (%p338) target = $region40
        $region39: #{tpu_custom_call.1} parent=11 // pred_region
          _
        $region40: #{tpu_custom_call.1} parent=11 // pred_fallthru
          _
        // Predicated region
        $region41: #{tpu_custom_call.1} parent=11 // pred_check
          %p341 = pneg %p216
        $region42: #{tpu_custom_call.1} parent=11 // pred_check_branch
          %343 = sbr.rel (%p341) target = $region44
        $region43: #{tpu_custom_call.1} parent=11 // pred_region
          %s345 = ssub.s32 256, 256
          %346 = vsyncadd [#allocation3], %s345
          %s347 = sshll.u32 [#allocation2], 4
          %s348 = int_to_ptr.vmem [resolvable:$true] %s347
          %353 = dma.hbm_to_vmem [thread:$0]  %s8, 256, %s348, [#allocation3], 64, 64, 4
        $region44: #{tpu_custom_call.1} parent=11 // pred_fallthru
          _
        // Predicated region
        $region45: #{tpu_custom_call.1} parent=11 // pred_check
          %p354 = pneg %p237
        $region46: #{tpu_custom_call.1} parent=11 // pred_check_branch
          %356 = sbr.rel (%p354) target = $region48
        $region47: #{tpu_custom_call.1} parent=11 // pred_region
          _
        $region48: #{tpu_custom_call.1} parent=11 // pred_fallthru
          _
        // Predicated region
        $region49: #{tpu_custom_call.1} parent=11 // pred_check
          %p357 = pneg %p258
        $region50: #{tpu_custom_call.1} parent=11 // pred_check_branch
          %359 = sbr.rel (%p357) target = $region52
        $region51: #{tpu_custom_call.1} parent=11 // pred_region
          _
        $region52: #{tpu_custom_call.1} parent=11 // pred_fallthru
          _
        // Predicated region
        $region53: #{tpu_custom_call.1} parent=11 // pred_check
          %p360 = pneg %p279
        $region54: #{tpu_custom_call.1} parent=11 // pred_check_branch
          %362 = sbr.rel (%p360) target = $region56
        $region55: #{tpu_custom_call.1} parent=11 // pred_region
          _
        $region56: #{tpu_custom_call.1} parent=11 // pred_fallthru
          _
      $region12: #{tpu_custom_call.1} parent=5 // pred_fallthru
        _
      %p363 = scmp.lt.s32.totalorder %s22, 2
      // Predicated region
      $region57: #{tpu_custom_call.1} parent=5 // pred_check
        %p364 = pneg %p363
      $region58: #{tpu_custom_call.1} parent=5 // pred_check_branch
        %366 = sbr.rel (%p364) target = $region60
      $region59: #{tpu_custom_call.1} parent=5 // pred_region
        // Predicated region
        $region61: #{tpu_custom_call.1} parent=59 // pred_check
          %p367 = pneg %p42
        $region62: #{tpu_custom_call.1} parent=59 // pred_check_branch
          %369 = sbr.rel (%p367) target = $region64
        $region63: #{tpu_custom_call.1} parent=59 // pred_region
          %p370 = scmp.lt.s32.totalorder %s22, 1
          %s371 = scalar_select %p370, %s22, 1
          %s372 = smul.addr %s371, 8
          %s373 = scalar_lea.vmem %s0, %s372
        $region64: #{tpu_custom_call.1} parent=59 // pred_fallthru
          _
      $region60: #{tpu_custom_call.1} parent=5 // pred_fallthru
        _
      %p374 = scmp.le.s32.totalorder 1, %s22
      %p375 = scmp.lt.s32.totalorder %s22, 3
      %p376 = pnand %p374, %p375
      %p377 = pneg %p376
      // Predicated region
      $region65: #{tpu_custom_call.1} parent=5 // pred_check
        _
      $region66: #{tpu_custom_call.1} parent=5 // pred_check_branch
        %379 = sbr.rel (%p376) target = $region68
      $region67: #{tpu_custom_call.1} parent=5 // pred_region
        %s380 = ssub.s32 %s22, 1
        // Predicated region
        $region69: #{tpu_custom_call.1} parent=67 // pred_check
          %p381 = pneg %p216
        $region70: #{tpu_custom_call.1} parent=67 // pred_check_branch
          %383 = sbr.rel (%p381) target = $region72
        $region71: #{tpu_custom_call.1} parent=67 // pred_region
          %384 = dma.done [#allocation3], 256
        $region72: #{tpu_custom_call.1} parent=67 // pred_fallthru
          _
        %p385 = scmp.lt.s32.totalorder %s27, 1
        %s386 = scalar_select %p385, %s27, 1
        %s387 = smul.addr %s386, 8
        %s388 = scalar_lea.vmem %s0, %s387
        %p389 = pneg %p48
        %p390 = pneg %p45
        %p391 = pneg %p69
        %p392 = pneg %p66
        %p393 = pneg %p90
        %p394 = pneg %p87
        %p395 = pneg %p111
        %p396 = pneg %p108
        %p397 = pneg %p132
        %p398 = pneg %p129
        %p399 = pneg %p153
        %p400 = pneg %p150
        %p401 = pneg %p174
        %p402 = pneg %p171
        %p403 = pneg %p195
        %p404 = pneg %p192
        %p405 = pneg %p216
        %p406 = pneg %p213
        %p407 = pneg %p237
        %p408 = pneg %p234
        %p409 = pneg %p258
        %p410 = pneg %p255
        %p411 = pneg %p279
        %p412 = pneg %p276
        %p413 = pneg %p305
        %p414 = pneg %p302
        %s415 = sand.u32 %s292, 1
        %s416 = scalar_lea.sflag [#allocation4], %s415
        %s417 = sand.u32 %s292, 1
        %s418 = smul.addr %s417, 8
        %s419 = scalar_lea.vmem [#allocation5], %s418
        %p420 = scmp.lt.s32.totalorder %s27, 1
        %s421 = scalar_select %p420, %s27, 1
        %s422 = smul.addr %s421, 8
        %s423 = scalar_lea.vmem %s0, %s422
        %v425 = vld [vmem:[%s423] sm:$0xff]
        %v426 = vld [vmem:[%s1] sm:$0x1]
        %v427 = vld [vmem:[%s2] sm:$0x1]
        %vm428 = vcmask 261120
        %v429 = vsel %vm428, %v425, 0.0
        %430 = vadd.xlane.f32.xlu0 %v429
        %v431 = vpop.xlane.xlu0 %430
        %v432 = vrcp.pop 32.0
        %v433 = vmul.f32 %v431, %v432
        %v434 = vsub.f32 %v425, %v433
        %v435 = vmul.f32 %v434, %v434
        %v436 = vsel %vm428, %v435, 0.0
        %437 = vadd.xlane.f32.xlu0 %v436
        %v438 = vpop.xlane.xlu0 %437
        %v439 = vmul.f32 %v438, %v432
        %v440 = vadd.f32 %v439, 1e-05
        %v441 = vrsqrt.pop %v440
        %v442 = vmul.f32 %v434, %v441
        %v444 = vlaneseq
        %v445 = vshrl.u32 %v444, 7
        %v446 = vsub.s32 0, %v445
        %v447 = vrot.slane %v426, %v446
        %v449 = vmul.f32 %v442, %v447
        %v451 = vlaneseq
        %v452 = vshrl.u32 %v451, 7
        %v453 = vsub.s32 0, %v452
        %v454 = vrot.slane %v427, %v453
        %v456 = vadd.f32 %v449, %v454
        %v457 = vpack.c.bf16 %v456, %v456
        %v458 = vld [vmem:[%s3] sm:$0xf]
        %v459 = vld [vmem:[%s3 + $0x4] sm:$0xf]
        %v460 = vld [vmem:[%s3 + $0x8] sm:$0xf]
        %v461 = vld [vmem:[%s3 + $0xc] sm:$0xf]
        %v466 = vunpack.c.l.b16 %v458
        %v467 = vunpack.c.l.b16 %v459
        %v468 = vunpack.c.l.b16 %v460
        %v469 = vunpack.c.l.b16 %v461
        %v470 = vpack.c.b16 %v467, %v466
        %v471 = vpack.c.b16 %v469, %v468
        %v475 = vsel %vm428, %v457, 0
        %477 = vmatprep.subr.bf16.mxu0 0
        %478 = vmatpush1.bf16.msra.mxu0 %v470
        %479 = vmatprep.subr.bf16.mxu0 0
        %480 = vmatpush1.bf16.msra.mxu0 %v471
        %481 = vmatprep.subr.bf16.mxu0 0
        %482 = vmatpush1.bf16.msra.mxu0 0
        %483 = vmatprep.subr.bf16.mxu0 0
        %484 = vmatpush1.bf16.msra.mxu0 0
        %485 = vmatprep.subr.bf16.mxu0 0
        %486 = vmatpush1.bf16.msra.mxu0 0
        %487 = vmatprep.subr.bf16.mxu0 0
        %488 = vmatpush1.bf16.msra.mxu0 0
        %489 = vmatprep.subr.bf16.mxu0 0
        %490 = vmatpush1.bf16.msra.mxu0 0
        %491 = vmatprep.subr.bf16.mxu0 0
        %492 = vmatpush1.bf16.msra.mxu0 0
        %493 = vmatprep.subr.bf16.mxu0 0
        %494 = vmatpush1.bf16.msra.mxu0 0
        %495 = vmatprep.subr.bf16.mxu0 0
        %496 = vmatpush1.bf16.msra.mxu0 0
        %497 = vmatprep.subr.bf16.mxu0 0
        %498 = vmatpush1.bf16.msra.mxu0 0
        %499 = vmatprep.subr.bf16.mxu0 0
        %500 = vmatpush1.bf16.msra.mxu0 0
        %501 = vmatprep.subr.bf16.mxu0 0
        %502 = vmatpush1.bf16.msra.mxu0 0
        %503 = vmatprep.subr.bf16.mxu0 0
        %504 = vmatpush1.bf16.msra.mxu0 0
        %505 = vmatprep.subr.bf16.mxu0 0
        %506 = vmatpush1.bf16.msra.mxu0 0
        %507 = vmatprep.subr.bf16.mxu0 0
        %508 = vmatpush1.bf16.msra.mxu0 0
        %509 = vmatprep.mubr.bf16.mxu0 0
        %510 = vmatmul.mubr.bf16.gmra.mrb[0].mxu0 %v475
        %v511 = vpop.f32.mrb[0].mxu0
        %v512 = vadd.f32 0.0, %v511
        %v513 = vpop.f32.mrb[0].mxu0
        %v514 = vpop.f32.mrb[0].mxu0
        %v515 = vpop.f32.mrb[0].mxu0
        %516 = vdwg.mxu0
        %v517 = vpack.c.bf16 %v512, %v512
        %519 = vrot.lane.b32.xlu0 %v517, 96
        %v520 = vpop.permute.xlu0 %519
        %vm521 = vcmask 64512
        %v523 = vsel %vm521, %v517, 0
        %v526 = vsel %vm521, %v520, 0
        %528 = vmatprep.subr.bf16.mxu0 0
        %529 = vmatpush1.bf16.xpose.msra.mxu0 %v526
        %530 = vmatprep.subr.bf16.mxu0 0
        %531 = vmatpush1.bf16.xpose.msra.mxu0 0
        %532 = vmatprep.subr.bf16.mxu0 0
        %533 = vmatpush1.bf16.xpose.msra.mxu0 0
        %534 = vmatprep.subr.bf16.mxu0 0
        %535 = vmatpush1.bf16.xpose.msra.mxu0 0
        %536 = vmatprep.subr.bf16.mxu0 0
        %537 = vmatpush1.bf16.xpose.msra.mxu0 0
        %538 = vmatprep.subr.bf16.mxu0 0
        %539 = vmatpush1.bf16.xpose.msra.mxu0 0
        %540 = vmatprep.subr.bf16.mxu0 0
        %541 = vmatpush1.bf16.xpose.msra.mxu0 0
        %542 = vmatprep.subr.bf16.mxu0 0
        %543 = vmatpush1.bf16.xpose.msra.mxu0 0
        %544 = vmatprep.subr.bf16.mxu0 0
        %545 = vmatpush1.bf16.xpose.msra.mxu0 0
        %546 = vmatprep.subr.bf16.mxu0 0
        %547 = vmatpush1.bf16.xpose.msra.mxu0 0
        %548 = vmatprep.subr.bf16.mxu0 0
        %549 = vmatpush1.bf16.xpose.msra.mxu0 0
        %550 = vmatprep.subr.bf16.mxu0 0
        %551 = vmatpush1.bf16.xpose.msra.mxu0 0
        %552 = vmatprep.subr.bf16.mxu0 0
        %553 = vmatpush1.bf16.xpose.msra.mxu0 0
        %554 = vmatprep.subr.bf16.mxu0 0
        %555 = vmatpush1.bf16.xpose.msra.mxu0 0
        %556 = vmatprep.subr.bf16.mxu0 0
        %557 = vmatpush1.bf16.xpose.msra.mxu0 0
        %558 = vmatprep.subr.bf16.mxu0 0
        %559 = vmatpush1.bf16.xpose.msra.mxu0 0
        %560 = vmatprep.mubr.bf16.mxu0 0
        %561 = vmatmul.mubr.bf16.gmra.mrb[0].mxu0 %v523
        %v562 = vpop.f32.mrb[0].mxu0
        %v563 = vadd.f32 0.0, %v562
        %v564 = vpop.f32.mrb[0].mxu0
        %v565 = vpop.f32.mrb[0].mxu0
        %v566 = vpop.f32.mrb[0].mxu0
        %567 = vdwg.mxu0
        %v568 = vsel %vm521, %v563, -inf
        %569 = vmax.xlane.f32.xlu0 %v568
        %v570 = vpop.xlane.xlu0 %569
        %v571 = vsub.f32 %v563, %v570
        %v572 = vmul.f32 %v571, 1.442695
        %v573 = vpow.pop %v572
        %v574 = vsel %vm521, %v573, 0.0
        %575 = vadd.xlane.f32.xlu0 %v574
        %v576 = vpop.xlane.xlu0 %575
        %v577 = vrcp.pop %v576
        %v578 = vpack.c.bf16 %v573, %v573
        %579 = vrot.lane.b32.xlu0 %v517, 64
        %v580 = vpop.permute.xlu0 %579
        %v582 = vsel %vm521, %v578, 0
        %vm584 = vcmask 1043456
        %v586 = vsel %vm584, %v580, 0
        %588 = vmatprep.subr.bf16.mxu0 0
        %589 = vmatpush1.bf16.msra.mxu0 %v586
        %590 = vmatprep.subr.bf16.mxu0 0
        %591 = vmatpush1.bf16.msra.mxu0 0
        %592 = vmatprep.subr.bf16.mxu0 0
        %593 = vmatpush1.bf16.msra.mxu0 0
        %594 = vmatprep.subr.bf16.mxu0 0
        %595 = vmatpush1.bf16.msra.mxu0 0
        %596 = vmatprep.subr.bf16.mxu0 0
        %597 = vmatpush1.bf16.msra.mxu0 0
        %598 = vmatprep.subr.bf16.mxu0 0
        %599 = vmatpush1.bf16.msra.mxu0 0
        %600 = vmatprep.subr.bf16.mxu0 0
        %601 = vmatpush1.bf16.msra.mxu0 0
        %602 = vmatprep.subr.bf16.mxu0 0
        %603 = vmatpush1.bf16.msra.mxu0 0
        %604 = vmatprep.subr.bf16.mxu0 0
        %605 = vmatpush1.bf16.msra.mxu0 0
        %606 = vmatprep.subr.bf16.mxu0 0
        %607 = vmatpush1.bf16.msra.mxu0 0
        %608 = vmatprep.subr.bf16.mxu0 0
        %609 = vmatpush1.bf16.msra.mxu0 0
        %610 = vmatprep.subr.bf16.mxu0 0
        %611 = vmatpush1.bf16.msra.mxu0 0
        %612 = vmatprep.subr.bf16.mxu0 0
        %613 = vmatpush1.bf16.msra.mxu0 0
        %614 = vmatprep.subr.bf16.mxu0 0
        %615 = vmatpush1.bf16.msra.mxu0 0
        %616 = vmatprep.subr.bf16.mxu0 0
        %617 = vmatpush1.bf16.msra.mxu0 0
        %618 = vmatprep.subr.bf16.mxu0 0
        %619 = vmatpush1.bf16.msra.mxu0 0
        %620 = vmatprep.mubr.bf16.mxu0 0
        %621 = vmatmul.mubr.bf16.gmra.mrb[0].mxu0 %v582
        %v622 = vpop.f32.mrb[0].mxu0
        %v623 = vadd.f32 0.0, %v622
        %v624 = vpop.f32.mrb[0].mxu0
        %v625 = vpop.f32.mrb[0].mxu0
        %v626 = vpop.f32.mrb[0].mxu0
        %627 = vdwg.mxu0
        %v628 = vmul.f32 %v623, %v577
        %v629 = vpack.c.bf16 %v628, %v628
        %v630 = vld [vmem:[%s4] sm:$0xf]
        %631 = vrot.lane.b32.xlu0 %v517, 120
        %v632 = vpop.permute.xlu0 %631
        %633 = vrot.lane.b32.xlu0 %v517, 88
        %v634 = vpop.permute.xlu0 %633
        %v636 = vsel %vm521, %v632, 0
        %v639 = vsel %vm521, %v634, 0
        %641 = vmatprep.subr.bf16.mxu0 0
        %642 = vmatpush1.bf16.xpose.msra.mxu0 %v639
        %643 = vmatprep.subr.bf16.mxu0 0
        %644 = vmatpush1.bf16.xpose.msra.mxu0 0
        %645 = vmatprep.subr.bf16.mxu0 0
        %646 = vmatpush1.bf16.xpose.msra.mxu0 0
        %647 = vmatprep.subr.bf16.mxu0 0
        %648 = vmatpush1.bf16.xpose.msra.mxu0 0
        %649 = vmatprep.subr.bf16.mxu0 0
        %650 = vmatpush1.bf16.xpose.msra.mxu0 0
        %651 = vmatprep.subr.bf16.mxu0 0
        %652 = vmatpush1.bf16.xpose.msra.mxu0 0
        %653 = vmatprep.subr.bf16.mxu0 0
        %654 = vmatpush1.bf16.xpose.msra.mxu0 0
        %655 = vmatprep.subr.bf16.mxu0 0
        %656 = vmatpush1.bf16.xpose.msra.mxu0 0
        %657 = vmatprep.subr.bf16.mxu0 0
        %658 = vmatpush1.bf16.xpose.msra.mxu0 0
        %659 = vmatprep.subr.bf16.mxu0 0
        %660 = vmatpush1.bf16.xpose.msra.mxu0 0
        %661 = vmatprep.subr.bf16.mxu0 0
        %662 = vmatpush1.bf16.xpose.msra.mxu0 0
        %663 = vmatprep.subr.bf16.mxu0 0
        %664 = vmatpush1.bf16.xpose.msra.mxu0 0
        %665 = vmatprep.subr.bf16.mxu0 0
        %666 = vmatpush1.bf16.xpose.msra.mxu0 0
        %667 = vmatprep.subr.bf16.mxu0 0
        %668 = vmatpush1.bf16.xpose.msra.mxu0 0
        %669 = vmatprep.subr.bf16.mxu0 0
        %670 = vmatpush1.bf16.xpose.msra.mxu0 0
        %671 = vmatprep.subr.bf16.mxu0 0
        %672 = vmatpush1.bf16.xpose.msra.mxu0 0
        %673 = vmatprep.mubr.bf16.mxu0 0
        %674 = vmatmul.mubr.bf16.gmra.mrb[0].mxu0 %v636
        %v675 = vpop.f32.mrb[0].mxu0
        %v676 = vadd.f32 0.0, %v675
        %v677 = vpop.f32.mrb[0].mxu0
        %v678 = vpop.f32.mrb[0].mxu0
        %v679 = vpop.f32.mrb[0].mxu0
        %680 = vdwg.mxu0
        %v681 = vsel %vm521, %v676, -inf
        %682 = vmax.xlane.f32.xlu0 %v681
        %v683 = vpop.xlane.xlu0 %682
        %v684 = vsub.f32 %v676, %v683
        %v685 = vmul.f32 %v684, 1.442695
        %v686 = vpow.pop %v685
        %v687 = vsel %vm521, %v686, 0.0
        %688 = vadd.xlane.f32.xlu0 %v687
        %v689 = vpop.xlane.xlu0 %688
        %v690 = vrcp.pop %v689
        %v691 = vpack.c.bf16 %v686, %v686
        %692 = vrot.lane.b32.xlu0 %v517, 56
        %v693 = vpop.permute.xlu0 %692
        %v695 = vsel %vm521, %v691, 0
        %v698 = vsel %vm584, %v693, 0
        %700 = vmatprep.subr.bf16.mxu0 0
        %701 = vmatpush1.bf16.msra.mxu0 %v698
        %702 = vmatprep.subr.bf16.mxu0 0
        %703 = vmatpush1.bf16.msra.mxu0 0
        %704 = vmatprep.subr.bf16.mxu0 0
        %705 = vmatpush1.bf16.msra.mxu0 0
        %706 = vmatprep.subr.bf16.mxu0 0
        %707 = vmatpush1.bf16.msra.mxu0 0
        %708 = vmatprep.subr.bf16.mxu0 0
        %709 = vmatpush1.bf16.msra.mxu0 0
        %710 = vmatprep.subr.bf16.mxu0 0
        %711 = vmatpush1.bf16.msra.mxu0 0
        %712 = vmatprep.subr.bf16.mxu0 0
        %713 = vmatpush1.bf16.msra.mxu0 0
        %714 = vmatprep.subr.bf16.mxu0 0
        %715 = vmatpush1.bf16.msra.mxu0 0
        %716 = vmatprep.subr.bf16.mxu0 0
        %717 = vmatpush1.bf16.msra.mxu0 0
        %718 = vmatprep.subr.bf16.mxu0 0
        %719 = vmatpush1.bf16.msra.mxu0 0
        %720 = vmatprep.subr.bf16.mxu0 0
        %721 = vmatpush1.bf16.msra.mxu0 0
        %722 = vmatprep.subr.bf16.mxu0 0
        %723 = vmatpush1.bf16.msra.mxu0 0
        %724 = vmatprep.subr.bf16.mxu0 0
        %725 = vmatpush1.bf16.msra.mxu0 0
        %726 = vmatprep.subr.bf16.mxu0 0
        %727 = vmatpush1.bf16.msra.mxu0 0
        %728 = vmatprep.subr.bf16.mxu0 0
        %729 = vmatpush1.bf16.msra.mxu0 0
        %730 = vmatprep.subr.bf16.mxu0 0
        %731 = vmatpush1.bf16.msra.mxu0 0
        %732 = vmatprep.mubr.bf16.mxu0 0
        %733 = vmatmul.mubr.bf16.gmra.mrb[0].mxu0 %v695
        %v734 = vpop.f32.mrb[0].mxu0
        %v735 = vadd.f32 0.0, %v734
        %v736 = vpop.f32.mrb[0].mxu0
        %v737 = vpop.f32.mrb[0].mxu0
        %v738 = vpop.f32.mrb[0].mxu0
        %739 = vdwg.mxu0
        %v740 = vmul.f32 %v735, %v690
        %v741 = vpack.c.bf16 %v740, %v740
        %s742 = scalar_lea.vmem %s4, 4
        %v743 = vld [vmem:[%s742] sm:$0xf]
        %v745 = vsel %vm521, %v741, 0
        %v748 = vsel %vm584, %v743, 0
        %750 = vmatprep.subr.bf16.mxu0 0
        %751 = vmatpush1.bf16.msra.mxu0 %v748
        %752 = vmatprep.subr.bf16.mxu0 0
        %753 = vmatpush1.bf16.msra.mxu0 0
        %754 = vmatprep.subr.bf16.mxu0 0
        %755 = vmatpush1.bf16.msra.mxu0 0
        %756 = vmatprep.subr.bf16.mxu0 0
        %757 = vmatpush1.bf16.msra.mxu0 0
        %758 = vmatprep.subr.bf16.mxu0 0
        %759 = vmatpush1.bf16.msra.mxu0 0
        %760 = vmatprep.subr.bf16.mxu0 0
        %761 = vmatpush1.bf16.msra.mxu0 0
        %762 = vmatprep.subr.bf16.mxu0 0
        %763 = vmatpush1.bf16.msra.mxu0 0
        %764 = vmatprep.subr.bf16.mxu0 0
        %765 = vmatpush1.bf16.msra.mxu0 0
        %766 = vmatprep.subr.bf16.mxu0 0
        %767 = vmatpush1.bf16.msra.mxu0 0
        %768 = vmatprep.subr.bf16.mxu0 0
        %769 = vmatpush1.bf16.msra.mxu0 0
        %770 = vmatprep.subr.bf16.mxu0 0
        %771 = vmatpush1.bf16.msra.mxu0 0
        %772 = vmatprep.subr.bf16.mxu0 0
        %773 = vmatpush1.bf16.msra.mxu0 0
        %774 = vmatprep.subr.bf16.mxu0 0
        %775 = vmatpush1.bf16.msra.mxu0 0
        %776 = vmatprep.subr.bf16.mxu0 0
        %777 = vmatpush1.bf16.msra.mxu0 0
        %778 = vmatprep.subr.bf16.mxu0 0
        %779 = vmatpush1.bf16.msra.mxu0 0
        %780 = vmatprep.subr.bf16.mxu0 0
        %781 = vmatpush1.bf16.msra.mxu0 0
        %782 = vmatprep.mubr.bf16.mxu0 0
        %783 = vmatmul.mubr.bf16.gmra.mrb[0].mxu0 %v745
        %v784 = vpop.f32.mrb[0].mxu0
        %v785 = vadd.f32 0.0, %v784
        %v786 = vpop.f32.mrb[0].mxu0
        %v787 = vpop.f32.mrb[0].mxu0
        %v788 = vpop.f32.mrb[0].mxu0
        %789 = vdwg.mxu0
        %v791 = vsel %vm521, %v629, 0
        %v794 = vsel %vm584, %v630, 0
        %796 = vmatprep.subr.bf16.mxu0 0
        %797 = vmatpush1.bf16.msra.mxu0 %v794
        %798 = vmatprep.subr.bf16.mxu0 0
        %799 = vmatpush1.bf16.msra.mxu0 0
        %800 = vmatprep.subr.bf16.mxu0 0
        %801 = vmatpush1.bf16.msra.mxu0 0
        %802 = vmatprep.subr.bf16.mxu0 0
        %803 = vmatpush1.bf16.msra.mxu0 0
        %804 = vmatprep.subr.bf16.mxu0 0
        %805 = vmatpush1.bf16.msra.mxu0 0
        %806 = vmatprep.subr.bf16.mxu0 0
        %807 = vmatpush1.bf16.msra.mxu0 0
        %808 = vmatprep.subr.bf16.mxu0 0
        %809 = vmatpush1.bf16.msra.mxu0 0
        %810 = vmatprep.subr.bf16.mxu0 0
        %811 = vmatpush1.bf16.msra.mxu0 0
        %812 = vmatprep.subr.bf16.mxu0 0
        %813 = vmatpush1.bf16.msra.mxu0 0
        %814 = vmatprep.subr.bf16.mxu0 0
        %815 = vmatpush1.bf16.msra.mxu0 0
        %816 = vmatprep.subr.bf16.mxu0 0
        %817 = vmatpush1.bf16.msra.mxu0 0
        %818 = vmatprep.subr.bf16.mxu0 0
        %819 = vmatpush1.bf16.msra.mxu0 0
        %820 = vmatprep.subr.bf16.mxu0 0
        %821 = vmatpush1.bf16.msra.mxu0 0
        %822 = vmatprep.subr.bf16.mxu0 0
        %823 = vmatpush1.bf16.msra.mxu0 0
        %824 = vmatprep.subr.bf16.mxu0 0
        %825 = vmatpush1.bf16.msra.mxu0 0
        %826 = vmatprep.subr.bf16.mxu0 0
        %827 = vmatpush1.bf16.msra.mxu0 0
        %828 = vmatprep.mubr.bf16.mxu0 0
        %829 = vmatmul.mubr.bf16.gmra.mrb[0].mxu0 %v791
        %v830 = vpop.f32.mrb[0].mxu0
        %v831 = vadd.f32 %v785, %v830
        %v832 = vpop.f32.mrb[0].mxu0
        %v833 = vpop.f32.mrb[0].mxu0
        %v834 = vpop.f32.mrb[0].mxu0
        %835 = vdwg.mxu0
        %836 = vrot.lane.b32.xlu0 %v517, 112
        %v837 = vpop.permute.xlu0 %836
        %838 = vrot.lane.b32.xlu0 %v517, 80
        %v839 = vpop.permute.xlu0 %838
        %v841 = vsel %vm521, %v837, 0
        %v844 = vsel %vm521, %v839, 0
        %846 = vmatprep.subr.bf16.mxu0 0
        %847 = vmatpush1.bf16.xpose.msra.mxu0 %v844
        %848 = vmatprep.subr.bf16.mxu0 0
        %849 = vmatpush1.bf16.xpose.msra.mxu0 0
        %850 = vmatprep.subr.bf16.mxu0 0
        %851 = vmatpush1.bf16.xpose.msra.mxu0 0
        %852 = vmatprep.subr.bf16.mxu0 0
        %853 = vmatpush1.bf16.xpose.msra.mxu0 0
        %854 = vmatprep.subr.bf16.mxu0 0
        %855 = vmatpush1.bf16.xpose.msra.mxu0 0
        %856 = vmatprep.subr.bf16.mxu0 0
        %857 = vmatpush1.bf16.xpose.msra.mxu0 0
        %858 = vmatprep.subr.bf16.mxu0 0
        %859 = vmatpush1.bf16.xpose.msra.mxu0 0
        %860 = vmatprep.subr.bf16.mxu0 0
        %861 = vmatpush1.bf16.xpose.msra.mxu0 0
        %862 = vmatprep.subr.bf16.mxu0 0
        %863 = vmatpush1.bf16.xpose.msra.mxu0 0
        %864 = vmatprep.subr.bf16.mxu0 0
        %865 = vmatpush1.bf16.xpose.msra.mxu0 0
        %866 = vmatprep.subr.bf16.mxu0 0
        %867 = vmatpush1.bf16.xpose.msra.mxu0 0
        %868 = vmatprep.subr.bf16.mxu0 0
        %869 = vmatpush1.bf16.xpose.msra.mxu0 0
        %870 = vmatprep.subr.bf16.mxu0 0
        %871 = vmatpush1.bf16.xpose.msra.mxu0 0
        %872 = vmatprep.subr.bf16.mxu0 0
        %873 = vmatpush1.bf16.xpose.msra.mxu0 0
        %874 = vmatprep.subr.bf16.mxu0 0
        %875 = vmatpush1.bf16.xpose.msra.mxu0 0
        %876 = vmatprep.subr.bf16.mxu0 0
        %877 = vmatpush1.bf16.xpose.msra.mxu0 0
        %878 = vmatprep.mubr.bf16.mxu0 0
        %879 = vmatmul.mubr.bf16.gmra.mrb[0].mxu0 %v841
        %v880 = vpop.f32.mrb[0].mxu0
        %v881 = vadd.f32 0.0, %v880
        %v882 = vpop.f32.mrb[0].mxu0
        %v883 = vpop.f32.mrb[0].mxu0
        %v884 = vpop.f32.mrb[0].mxu0
        %885 = vdwg.mxu0
        %v886 = vsel %vm521, %v881, -inf
        %887 = vmax.xlane.f32.xlu0 %v886
        %v888 = vpop.xlane.xlu0 %887
        %v889 = vsub.f32 %v881, %v888
        %v890 = vmul.f32 %v889, 1.442695
        %v891 = vpow.pop %v890
        %v892 = vsel %vm521, %v891, 0.0
        %893 = vadd.xlane.f32.xlu0 %v892
        %v894 = vpop.xlane.xlu0 %893
        %v895 = vrcp.pop %v894
        %v896 = vpack.c.bf16 %v891, %v891
        %897 = vrot.lane.b32.xlu0 %v517, 48
        %v898 = vpop.permute.xlu0 %897
        %v900 = vsel %vm521, %v896, 0
        %v903 = vsel %vm584, %v898, 0
        %905 = vmatprep.subr.bf16.mxu0 0
        %906 = vmatpush1.bf16.msra.mxu0 %v903
        %907 = vmatprep.subr.bf16.mxu0 0
        %908 = vmatpush1.bf16.msra.mxu0 0
        %909 = vmatprep.subr.bf16.mxu0 0
        %910 = vmatpush1.bf16.msra.mxu0 0
        %911 = vmatprep.subr.bf16.mxu0 0
        %912 = vmatpush1.bf16.msra.mxu0 0
        %913 = vmatprep.subr.bf16.mxu0 0
        %914 = vmatpush1.bf16.msra.mxu0 0
        %915 = vmatprep.subr.bf16.mxu0 0
        %916 = vmatpush1.bf16.msra.mxu0 0
        %917 = vmatprep.subr.bf16.mxu0 0
        %918 = vmatpush1.bf16.msra.mxu0 0
        %919 = vmatprep.subr.bf16.mxu0 0
        %920 = vmatpush1.bf16.msra.mxu0 0
        %921 = vmatprep.subr.bf16.mxu0 0
        %922 = vmatpush1.bf16.msra.mxu0 0
        %923 = vmatprep.subr.bf16.mxu0 0
        %924 = vmatpush1.bf16.msra.mxu0 0
        %925 = vmatprep.subr.bf16.mxu0 0
        %926 = vmatpush1.bf16.msra.mxu0 0
        %927 = vmatprep.subr.bf16.mxu0 0
        %928 = vmatpush1.bf16.msra.mxu0 0
        %929 = vmatprep.subr.bf16.mxu0 0
        %930 = vmatpush1.bf16.msra.mxu0 0
        %931 = vmatprep.subr.bf16.mxu0 0
        %932 = vmatpush1.bf16.msra.mxu0 0
        %933 = vmatprep.subr.bf16.mxu0 0
        %934 = vmatpush1.bf16.msra.mxu0 0
        %935 = vmatprep.subr.bf16.mxu0 0
        %936 = vmatpush1.bf16.msra.mxu0 0
        %937 = vmatprep.mubr.bf16.mxu0 0
        %938 = vmatmul.mubr.bf16.gmra.mrb[0].mxu0 %v900
        %v939 = vpop.f32.mrb[0].mxu0
        %v940 = vadd.f32 0.0, %v939
        %v941 = vpop.f32.mrb[0].mxu0
        %v942 = vpop.f32.mrb[0].mxu0
        %v943 = vpop.f32.mrb[0].mxu0
        %944 = vdwg.mxu0
        %v945 = vmul.f32 %v940, %v895
        %v946 = vpack.c.bf16 %v945, %v945
        %s947 = scalar_lea.vmem %s4, 8
        %v948 = vld [vmem:[%s947] sm:$0xf]
        %v950 = vsel %vm521, %v946, 0
        %v953 = vsel %vm584, %v948, 0
        %955 = vmatprep.subr.bf16.mxu0 0
        %956 = vmatpush1.bf16.msra.mxu0 %v953
        %957 = vmatprep.subr.bf16.mxu0 0
        %958 = vmatpush1.bf16.msra.mxu0 0
        %959 = vmatprep.subr.bf16.mxu0 0
        %960 = vmatpush1.bf16.msra.mxu0 0
        %961 = vmatprep.subr.bf16.mxu0 0
        %962 = vmatpush1.bf16.msra.mxu0 0
        %963 = vmatprep.subr.bf16.mxu0 0
        %964 = vmatpush1.bf16.msra.mxu0 0
        %965 = vmatprep.subr.bf16.mxu0 0
        %966 = vmatpush1.bf16.msra.mxu0 0
        %967 = vmatprep.subr.bf16.mxu0 0
        %968 = vmatpush1.bf16.msra.mxu0 0
        %969 = vmatprep.subr.bf16.mxu0 0
        %970 = vmatpush1.bf16.msra.mxu0 0
        %971 = vmatprep.subr.bf16.mxu0 0
        %972 = vmatpush1.bf16.msra.mxu0 0
        %973 = vmatprep.subr.bf16.mxu0 0
        %974 = vmatpush1.bf16.msra.mxu0 0
        %975 = vmatprep.subr.bf16.mxu0 0
        %976 = vmatpush1.bf16.msra.mxu0 0
        %977 = vmatprep.subr.bf16.mxu0 0
        %978 = vmatpush1.bf16.msra.mxu0 0
        %979 = vmatprep.subr.bf16.mxu0 0
        %980 = vmatpush1.bf16.msra.mxu0 0
        %981 = vmatprep.subr.bf16.mxu0 0
        %982 = vmatpush1.bf16.msra.mxu0 0
        %983 = vmatprep.subr.bf16.mxu0 0
        %984 = vmatpush1.bf16.msra.mxu0 0
        %985 = vmatprep.subr.bf16.mxu0 0
        %986 = vmatpush1.bf16.msra.mxu0 0
        %987 = vmatprep.mubr.bf16.mxu0 0
        %988 = vmatmul.mubr.bf16.gmra.mrb[0].mxu0 %v950
        %v989 = vpop.f32.mrb[0].mxu0
        %v990 = vadd.f32 0.0, %v989
        %v991 = vpop.f32.mrb[0].mxu0
        %v992 = vpop.f32.mrb[0].mxu0
        %v993 = vpop.f32.mrb[0].mxu0
        %994 = vdwg.mxu0
        %v995 = vadd.f32 %v831, %v990
        %996 = vrot.lane.b32.xlu0 %v517, 104
        %v997 = vpop.permute.xlu0 %996
        %998 = vrot.lane.b32.xlu0 %v517, 72
        %v999 = vpop.permute.xlu0 %998
        %v1001 = vsel %vm521, %v997, 0
        %v1004 = vsel %vm521, %v999, 0
        %1006 = vmatprep.subr.bf16.mxu0 0
        %1007 = vmatpush1.bf16.xpose.msra.mxu0 %v1004
        %1008 = vmatprep.subr.bf16.mxu0 0
        %1009 = vmatpush1.bf16.xpose.msra.mxu0 0
        %1010 = vmatprep.subr.bf16.mxu0 0
        %1011 = vmatpush1.bf16.xpose.msra.mxu0 0
        %1012 = vmatprep.subr.bf16.mxu0 0
        %1013 = vmatpush1.bf16.xpose.msra.mxu0 0
        %1014 = vmatprep.subr.bf16.mxu0 0
        %1015 = vmatpush1.bf16.xpose.msra.mxu0 0
        %1016 = vmatprep.subr.bf16.mxu0 0
        %1017 = vmatpush1.bf16.xpose.msra.mxu0 0
        %1018 = vmatprep.subr.bf16.mxu0 0
        %1019 = vmatpush1.bf16.xpose.msra.mxu0 0
        %1020 = vmatprep.subr.bf16.mxu0 0
        %1021 = vmatpush1.bf16.xpose.msra.mxu0 0
        %1022 = vmatprep.subr.bf16.mxu0 0
        %1023 = vmatpush1.bf16.xpose.msra.mxu0 0
        %1024 = vmatprep.subr.bf16.mxu0 0
        %1025 = vmatpush1.bf16.xpose.msra.mxu0 0
        %1026 = vmatprep.subr.bf16.mxu0 0
        %1027 = vmatpush1.bf16.xpose.msra.mxu0 0
        %1028 = vmatprep.subr.bf16.mxu0 0
        %1029 = vmatpush1.bf16.xpose.msra.mxu0 0
        %1030 = vmatprep.subr.bf16.mxu0 0
        %1031 = vmatpush1.bf16.xpose.msra.mxu0 0
        %1032 = vmatprep.subr.bf16.mxu0 0
        %1033 = vmatpush1.bf16.xpose.msra.mxu0 0
        %1034 = vmatprep.subr.bf16.mxu0 0
        %1035 = vmatpush1.bf16.xpose.msra.mxu0 0
        %1036 = vmatprep.subr.bf16.mxu0 0
        %1037 = vmatpush1.bf16.xpose.msra.mxu0 0
        %1038 = vmatprep.mubr.bf16.mxu0 0
        %1039 = vmatmul.mubr.bf16.gmra.mrb[0].mxu0 %v1001
        %v1040 = vpop.f32.mrb[0].mxu0
        %v1041 = vadd.f32 0.0, %v1040
        %v1042 = vpop.f32.mrb[0].mxu0
        %v1043 = vpop.f32.mrb[0].mxu0
        %v1044 = vpop.f32.mrb[0].mxu0
        %1045 = vdwg.mxu0
        %v1046 = vsel %vm521, %v1041, -inf
        %1047 = vmax.xlane.f32.xlu0 %v1046
        %v1048 = vpop.xlane.xlu0 %1047
        %v1049 = vsub.f32 %v1041, %v1048
        %v1050 = vmul.f32 %v1049, 1.442695
        %v1051 = vpow.pop %v1050
        %v1052 = vsel %vm521, %v1051, 0.0
        %1053 = vadd.xlane.f32.xlu0 %v1052
        %v1054 = vpop.xlane.xlu0 %1053
        %v1055 = vrcp.pop %v1054
        %v1056 = vpack.c.bf16 %v1051, %v1051
        %1057 = vrot.lane.b32.xlu0 %v517, 40
        %v1058 = vpop.permute.xlu0 %1057
        %v1060 = vsel %vm521, %v1056, 0
        %v1063 = vsel %vm584, %v1058, 0
        %1065 = vmatprep.subr.bf16.mxu0 0
        %1066 = vmatpush1.bf16.msra.mxu0 %v1063
        %1067 = vmatprep.subr.bf16.mxu0 0
        %1068 = vmatpush1.bf16.msra.mxu0 0
        %1069 = vmatprep.subr.bf16.mxu0 0
        %1070 = vmatpush1.bf16.msra.mxu0 0
        %1071 = vmatprep.subr.bf16.mxu0 0
        %1072 = vmatpush1.bf16.msra.mxu0 0
        %1073 = vmatprep.subr.bf16.mxu0 0
        %1074 = vmatpush1.bf16.msra.mxu0 0
        %1075 = vmatprep.subr.bf16.mxu0 0
        %1076 = vmatpush1.bf16.msra.mxu0 0
        %1077 = vmatprep.subr.bf16.mxu0 0
        %1078 = vmatpush1.bf16.msra.mxu0 0
        %1079 = vmatprep.subr.bf16.mxu0 0
        %1080 = vmatpush1.bf16.msra.mxu0 0
        %1081 = vmatprep.subr.bf16.mxu0 0
        %1082 = vmatpush1.bf16.msra.mxu0 0
        %1083 = vmatprep.subr.bf16.mxu0 0
        %1084 = vmatpush1.bf16.msra.mxu0 0
        %1085 = vmatprep.subr.bf16.mxu0 0
        %1086 = vmatpush1.bf16.msra.mxu0 0
        %1087 = vmatprep.subr.bf16.mxu0 0
        %1088 = vmatpush1.bf16.msra.mxu0 0
        %1089 = vmatprep.subr.bf16.mxu0 0
        %1090 = vmatpush1.bf16.msra.mxu0 0
        %1091 = vmatprep.subr.bf16.mxu0 0
        %1092 = vmatpush1.bf16.msra.mxu0 0
        %1093 = vmatprep.subr.bf16.mxu0 0
        %1094 = vmatpush1.bf16.msra.mxu0 0
        %1095 = vmatprep.subr.bf16.mxu0 0
        %1096 = vmatpush1.bf16.msra.mxu0 0
        %1097 = vmatprep.mubr.bf16.mxu0 0
        %1098 = vmatmul.mubr.bf16.gmra.mrb[0].mxu0 %v1060
        %v1099 = vpop.f32.mrb[0].mxu0
        %v1100 = vadd.f32 0.0, %v1099
        %v1101 = vpop.f32.mrb[0].mxu0
        %v1102 = vpop.f32.mrb[0].mxu0
        %v1103 = vpop.f32.mrb[0].mxu0
        %1104 = vdwg.mxu0
        %v1105 = vmul.f32 %v1100, %v1055
        %v1106 = vpack.c.bf16 %v1105, %v1105
        %s1107 = scalar_lea.vmem %s4, 12
        %v1108 = vld [vmem:[%s1107] sm:$0xf]
        %v1110 = vsel %vm521, %v1106, 0
        %v1113 = vsel %vm584, %v1108, 0
        %1115 = vmatprep.subr.bf16.mxu0 0
        %1116 = vmatpush1.bf16.msra.mxu0 %v1113
        %1117 = vmatprep.subr.bf16.mxu0 0
        %1118 = vmatpush1.bf16.msra.mxu0 0
        %1119 = vmatprep.subr.bf16.mxu0 0
        %1120 = vmatpush1.bf16.msra.mxu0 0
        %1121 = vmatprep.subr.bf16.mxu0 0
        %1122 = vmatpush1.bf16.msra.mxu0 0
        %1123 = vmatprep.subr.bf16.mxu0 0
        %1124 = vmatpush1.bf16.msra.mxu0 0
        %1125 = vmatprep.subr.bf16.mxu0 0
        %1126 = vmatpush1.bf16.msra.mxu0 0
        %1127 = vmatprep.subr.bf16.mxu0 0
        %1128 = vmatpush1.bf16.msra.mxu0 0
        %1129 = vmatprep.subr.bf16.mxu0 0
        %1130 = vmatpush1.bf16.msra.mxu0 0
        %1131 = vmatprep.subr.bf16.mxu0 0
        %1132 = vmatpush1.bf16.msra.mxu0 0
        %1133 = vmatprep.subr.bf16.mxu0 0
        %1134 = vmatpush1.bf16.msra.mxu0 0
        %1135 = vmatprep.subr.bf16.mxu0 0
        %1136 = vmatpush1.bf16.msra.mxu0 0
        %1137 = vmatprep.subr.bf16.mxu0 0
        %1138 = vmatpush1.bf16.msra.mxu0 0
        %1139 = vmatprep.subr.bf16.mxu0 0
        %1140 = vmatpush1.bf16.msra.mxu0 0
        %1141 = vmatprep.subr.bf16.mxu0 0
        %1142 = vmatpush1.bf16.msra.mxu0 0
        %1143 = vmatprep.subr.bf16.mxu0 0
        %1144 = vmatpush1.bf16.msra.mxu0 0
        %1145 = vmatprep.subr.bf16.mxu0 0
        %1146 = vmatpush1.bf16.msra.mxu0 0
        %1147 = vmatprep.mubr.bf16.mxu0 0
        %1148 = vmatmul.mubr.bf16.gmra.mrb[0].mxu0 %v1110
        %v1149 = vpop.f32.mrb[0].mxu0
        %v1150 = vadd.f32 0.0, %v1149
        %v1151 = vpop.f32.mrb[0].mxu0
        %v1152 = vpop.f32.mrb[0].mxu0
        %v1153 = vpop.f32.mrb[0].mxu0
        %1154 = vdwg.mxu0
        %v1155 = vadd.f32 %v995, %v1150
        %v1156 = vadd.f32 %v425, %v1155
        %v1157 = vld [vmem:[%s5] sm:$0x1]
        %v1159 = vlaneseq
        %v1160 = vshrl.u32 %v1159, 7
        %v1161 = vsub.s32 0, %v1160
        %v1162 = vrot.slane %v1157, %v1161
        %v1164 = vadd.f32 %v1156, %v1162
        %v1165 = vld [vmem:[%s6] sm:$0x1]
        %v1166 = vld [vmem:[%s7] sm:$0x1]
        %v1167 = vsel %vm428, %v1164, 0.0
        %1168 = vadd.xlane.f32.xlu0 %v1167
        %v1169 = vpop.xlane.xlu0 %1168
        %v1170 = vmul.f32 %v1169, %v432
        %v1171 = vsub.f32 %v1164, %v1170
        %v1172 = vmul.f32 %v1171, %v1171
        %v1173 = vsel %vm428, %v1172, 0.0
        %1174 = vadd.xlane.f32.xlu0 %v1173
        %v1175 = vpop.xlane.xlu0 %1174
        %v1176 = vmul.f32 %v1175, %v432
        %v1177 = vadd.f32 %v1176, 1e-05
        %v1178 = vrsqrt.pop %v1177
        %v1179 = vmul.f32 %v1171, %v1178
        %v1181 = vlaneseq
        %v1182 = vshrl.u32 %v1181, 7
        %v1183 = vsub.s32 0, %v1182
        %v1184 = vrot.slane %v1165, %v1183
        %v1186 = vmul.f32 %v1179, %v1184
        %v1188 = vlaneseq
        %v1189 = vshrl.u32 %v1188, 7
        %v1190 = vsub.s32 0, %v1189
        %v1191 = vrot.slane %v1166, %v1190
        %v1193 = vadd.f32 %v1186, %v1191
        %v1194 = vpack.c.bf16 %v1193, %v1193
        %v1195 = vld [vmem:[#allocation2] sm:$0xf]
        %v1196 = vld [vmem:[#allocation2 + $0x4] sm:$0xf]
        %v1197 = vld [vmem:[#allocation2 + $0x8] sm:$0xf]
        %v1198 = vld [vmem:[#allocation2 + $0xc] sm:$0xf]
        %v1199 = vld [vmem:[%s9] sm:$0x1]
        %v1201 = vlaneseq
        %v1202 = vshrl.u32 %v1201, 7
        %v1203 = vsub.s32 0, %v1202
        %v1204 = vrot.slane %v1199, %v1203
        %v1210 = vunpack.c.l.b16 %v1195
        %v1211 = vunpack.c.l.b16 %v1196
        %v1212 = vunpack.c.l.b16 %v1197
        %v1213 = vunpack.c.l.b16 %v1198
        %v1214 = vpack.c.b16 %v1211, %v1210
        %v1215 = vpack.c.b16 %v1213, %v1212
        %v1219 = vsel %vm428, %v1194, 0
        %1221 = vmatprep.subr.bf16.mxu0 0
        %1222 = vmatpush1.bf16.msra.mxu0 %v1214
        %1223 = vmatprep.subr.bf16.mxu0 0
        %1224 = vmatpush1.bf16.msra.mxu0 %v1215
        %1225 = vmatprep.subr.bf16.mxu0 0
        %1226 = vmatpush1.bf16.msra.mxu0 0
        %1227 = vmatprep.subr.bf16.mxu0 0
        %1228 = vmatpush1.bf16.msra.mxu0 0
        %1229 = vmatprep.subr.bf16.mxu0 0
        %1230 = vmatpush1.bf16.msra.mxu0 0
        %1231 = vmatprep.subr.bf16.mxu0 0
        %1232 = vmatpush1.bf16.msra.mxu0 0
        %1233 = vmatprep.subr.bf16.mxu0 0
        %1234 = vmatpush1.bf16.msra.mxu0 0
        %1235 = vmatprep.subr.bf16.mxu0 0
        %1236 = vmatpush1.bf16.msra.mxu0 0
        %1237 = vmatprep.subr.bf16.mxu0 0
        %1238 = vmatpush1.bf16.msra.mxu0 0
        %1239 = vmatprep.subr.bf16.mxu0 0
        %1240 = vmatpush1.bf16.msra.mxu0 0
        %1241 = vmatprep.subr.bf16.mxu0 0
        %1242 = vmatpush1.bf16.msra.mxu0 0
        %1243 = vmatprep.subr.bf16.mxu0 0
        %1244 = vmatpush1.bf16.msra.mxu0 0
        %1245 = vmatprep.subr.bf16.mxu0 0
        %1246 = vmatpush1.bf16.msra.mxu0 0
        %1247 = vmatprep.subr.bf16.mxu0 0
        %1248 = vmatpush1.bf16.msra.mxu0 0
        %1249 = vmatprep.subr.bf16.mxu0 0
        %1250 = vmatpush1.bf16.msra.mxu0 0
        %1251 = vmatprep.subr.bf16.mxu0 0
        %1252 = vmatpush1.bf16.msra.mxu0 0
        %1253 = vmatprep.mubr.bf16.mxu0 0
        %1254 = vmatmul.mubr.bf16.gmra.mrb[0].mxu0 %v1219
        %v1255 = vpop.f32.mrb[0].mxu0
        %v1256 = vadd.f32 %v1204, %v1255
        %v1257 = vpop.f32.mrb[0].mxu0
        %v1258 = vpop.f32.mrb[0].mxu0
        %v1259 = vpop.f32.mrb[0].mxu0
        %1260 = vdwg.mxu0
        %v1261 = vmul.f32 %v1256, 0.5
        %v1262 = vmul.f32 %v1256, 0.044715
        %v1263 = vmul.f32 %v1262, %v1256
        %v1264 = vmul.f32 %v1263, %v1256
        %v1265 = vadd.f32 %v1256, %v1264
        %v1266 = vmul.f32 %v1265, 0.7978846
        %v1267 = vtanh.pop %v1266
        %v1268 = vadd.f32 %v1267, 1.0
        %v1269 = vmul.f32 %v1261, %v1268
        %v1270 = vpack.c.bf16 %v1269, %v1269
        %v1271 = vld [vmem:[%s10] sm:$0xf]
        %v1272 = vld [vmem:[%s10 + $0x4] sm:$0xf]
        %v1273 = vld [vmem:[%s10 + $0x8] sm:$0xf]
        %v1274 = vld [vmem:[%s10 + $0xc] sm:$0xf]
        %v1275 = vld [vmem:[%s10 + $0x10] sm:$0xf]
        %v1276 = vld [vmem:[%s10 + $0x14] sm:$0xf]
        %v1277 = vld [vmem:[%s10 + $0x18] sm:$0xf]
        %v1278 = vld [vmem:[%s10 + $0x1c] sm:$0xf]
        %v1287 = vunpack.c.l.b16 %v1271
        %v1288 = vunpack.c.l.b16 %v1272
        %v1289 = vunpack.c.l.b16 %v1273
        %v1290 = vunpack.c.l.b16 %v1274
        %v1291 = vunpack.c.l.b16 %v1275
        %v1292 = vunpack.c.l.b16 %v1276
        %v1293 = vunpack.c.l.b16 %v1277
        %v1294 = vunpack.c.l.b16 %v1278
        %v1295 = vpack.c.b16 %v1288, %v1287
        %v1296 = vpack.c.b16 %v1290, %v1289
        %v1297 = vpack.c.b16 %v1292, %v1291
        %v1298 = vpack.c.b16 %v1294, %v1293
        %vm1303 = vcmask 523264
        %v1305 = vsel %vm1303, %v1270, 0
        %1307 = vmatprep.subr.bf16.mxu0 0
        %1308 = vmatpush1.bf16.msra.mxu0 %v1295
        %1309 = vmatprep.subr.bf16.mxu0 0
        %1310 = vmatpush1.bf16.msra.mxu0 %v1296
        %1311 = vmatprep.subr.bf16.mxu0 0
        %1312 = vmatpush1.bf16.msra.mxu0 %v1297
        %1313 = vmatprep.subr.bf16.mxu0 0
        %1314 = vmatpush1.bf16.msra.mxu0 %v1298
        %1315 = vmatprep.subr.bf16.mxu0 0
        %1316 = vmatpush1.bf16.msra.mxu0 0
        %1317 = vmatprep.subr.bf16.mxu0 0
        %1318 = vmatpush1.bf16.msra.mxu0 0
        %1319 = vmatprep.subr.bf16.mxu0 0
        %1320 = vmatpush1.bf16.msra.mxu0 0
        %1321 = vmatprep.subr.bf16.mxu0 0
        %1322 = vmatpush1.bf16.msra.mxu0 0
        %1323 = vmatprep.subr.bf16.mxu0 0
        %1324 = vmatpush1.bf16.msra.mxu0 0
        %1325 = vmatprep.subr.bf16.mxu0 0
        %1326 = vmatpush1.bf16.msra.mxu0 0
        %1327 = vmatprep.subr.bf16.mxu0 0
        %1328 = vmatpush1.bf16.msra.mxu0 0
        %1329 = vmatprep.subr.bf16.mxu0 0
        %1330 = vmatpush1.bf16.msra.mxu0 0
        %1331 = vmatprep.subr.bf16.mxu0 0
        %1332 = vmatpush1.bf16.msra.mxu0 0
        %1333 = vmatprep.subr.bf16.mxu0 0
        %1334 = vmatpush1.bf16.msra.mxu0 0
        %1335 = vmatprep.subr.bf16.mxu0 0
        %1336 = vmatpush1.bf16.msra.mxu0 0
        %1337 = vmatprep.subr.bf16.mxu0 0
        %1338 = vmatpush1.bf16.msra.mxu0 0
        %1339 = vmatprep.mubr.bf16.mxu0 0
        %1340 = vmatmul.mubr.bf16.gmra.mrb[0].mxu0 %v1305
        %v1341 = vpop.f32.mrb[0].mxu0
        %v1342 = vadd.f32 0.0, %v1341
        %v1343 = vpop.f32.mrb[0].mxu0
        %v1344 = vpop.f32.mrb[0].mxu0
        %v1345 = vpop.f32.mrb[0].mxu0
        %1346 = vdwg.mxu0
        %v1347 = vadd.f32 %v1164, %v1342
        %v1348 = vld [vmem:[%s11] sm:$0x1]
        %v1350 = vlaneseq
        %v1351 = vshrl.u32 %v1350, 7
        %v1352 = vsub.s32 0, %v1351
        %v1353 = vrot.slane %v1348, %v1352
        %v1355 = vadd.f32 %v1347, %v1353
        %1356 = vst.msk [vmem:[%s419] sm:$0xff] %vm428, %v1355
        %s1357 = sand.u32 %s292, 1
        %s1358 = scalar_lea.sflag [#allocation4], %s1357
        %s1359 = sand.u32 %s292, 1
        %s1360 = smul.addr %s1359, 8
        %s1361 = scalar_lea.vmem [#allocation5], %s1360
        // Predicated region
        $region73: #{tpu_custom_call.1} parent=67 // pred_check
          %p1362 = pneg %p302
        $region74: #{tpu_custom_call.1} parent=67 // pred_check_branch
          %1364 = sbr.rel (%p1362) target = $region76
        $region75: #{tpu_custom_call.1} parent=67 // pred_region
          %s1366 = ssub.s32 128, 128
          %1367 = vsyncadd %s1358, %s1366
          %s1368 = smul.addr %s27, 128
          %s1369 = scalar_lea.hbm %s12, %s1368
          %s1371 = sshll.u32 %s1361, 4
          %s1372 = int_to_ptr.vmem [resolvable:$true] %s1371
          %1374 = dma.vmem_to_hbm [thread:$0]  %s1372, 128, %s1369, %s1358
        $region76: #{tpu_custom_call.1} parent=67 // pred_fallthru
          _
      $region68: #{tpu_custom_call.1} parent=5 // pred_fallthru
        _
      %p1375 = scmp.le.s32.totalorder 2, %s22
      // Predicated region
      $region77: #{tpu_custom_call.1} parent=5 // pred_check
        %p1376 = pneg %p1375
      $region78: #{tpu_custom_call.1} parent=5 // pred_check_branch
        %1378 = sbr.rel (%p1376) target = $region80
      $region79: #{tpu_custom_call.1} parent=5 // pred_region
        %s1379 = ssub.s32 %s22, 2
        // Predicated region
        $region81: #{tpu_custom_call.1} parent=79 // pred_check
          %p1380 = pneg %p308
        $region82: #{tpu_custom_call.1} parent=79 // pred_check_branch
          %1382 = sbr.rel (%p1380) target = $region84
        $region83: #{tpu_custom_call.1} parent=79 // pred_region
          %s1383 = sand.u32 %s293, 1
          %s1384 = scalar_lea.sflag [#allocation4], %s1383
          %s1385 = sand.u32 %s293, 1
          %s1386 = smul.addr %s1385, 8
          %s1387 = scalar_lea.vmem [#allocation5], %s1386
          %1388 = dma.done %s1384, 128
        $region84: #{tpu_custom_call.1} parent=79 // pred_fallthru
          _
      $region80: #{tpu_custom_call.1} parent=5 // pred_fallthru
        _
    $region6: #{tpu_custom_call.1} parent=1 // loop_footer
      %s26 = sadd.s32 1, %s22
    $region7: #{tpu_custom_call.1} parent=1 // loop_footer_branch
      %21 = sbr.rel target = $region3
    $region8: #{tpu_custom_call.1} parent=1 // loop_exit
      _
    %1389 = vsyncpa [#allocation3], 1
    %s1390 = scalar_lea.sflag [#allocation3], 1
    %1391 = vsyncpa %s1390, 1
    %1392 = vsyncpa [#allocation4], 1
    %s1393 = scalar_lea.sflag [#allocation4], 1
    %1394 = vsyncpa %s1393, 1

</llo_original>
